<compile_context>
chip_gen: v7x
topology: tpu7x:2x2x1
jax: 0.10.0
libtpu: 0.0.40
codegen_flags: <defaults>
</compile_context>

<pallas_src>
import functools

import jax
import jax.numpy as jnp
from jax.experimental import pallas as pl
from jax.experimental.pallas import tpu as pltpu

EPS = 1e-5  # torch.nn.LayerNorm default


# ---------------------------------------------------------------- helpers ---
def _layernorm(x, gamma, beta):
    mu = jnp.mean(x, axis=-1, keepdims=True)
    var = jnp.mean((x - mu) ** 2, axis=-1, keepdims=True)  # biased, like torch
    return (x - mu) * jax.lax.rsqrt(var + EPS) * gamma + beta


def _gelu_exact(x):
    # torch.nn.GELU default = exact erf-based GELU
    return 0.5 * x * (1.0 + jax.lax.erf(x * 0.7071067811865476))


# ------------------------------------------------------------ fused kernel ---
def _vit_kernel(
    patches_ref,                  # (1, S_pad, Pf) f32 (row 0 & pad rows zero)
    w_pe_ref,                     # (Pf, D)        bf16
    base_ref,                     # (S_pad, D)     f32 (cls+pos / pos+b_pe / 0)
    ln1_g_ref, ln1_b_ref,         # (1, D) f32
    wqkv_ref,                     # (D, 3*dq_pad)  bf16 (scale folded into Q)
    wo_ref, bo_ref,               # (dq_pad, D) bf16, (1, D) f32
    ln2_g_ref, ln2_b_ref,         # (1, D) f32
    w1_ref, b1_ref,               # (D, mlp) bf16, (1, mlp) f32
    w2_ref, b2_ref,               # (mlp, D) bf16, (1, D) f32
    lnh_g_ref, lnh_b_ref,         # (1, D) f32
    wh_ref, bh_ref,               # (D, C_pad) bf16, (1, C_pad) f32
    o_ref,                        # (1, 1, C_pad) f32
    x_ref,                        # VMEM scratch (S_pad, D) f32
    *, S, S_pad, D, dq_pad, layers, unroll,
):
    f32 = jnp.float32
    bf16 = jnp.bfloat16
    mlp = w1_ref.shape[1]

    # ---- hoisted loop-invariant reads / broadcasts --------------------------
    wqkv = wqkv_ref[...]
    wo = wo_ref[...]
    w1 = w1_ref[...]
    w2 = w2_ref[...]
    ln1_g = jnp.broadcast_to(ln1_g_ref[...], (S_pad, D))
    ln1_b = jnp.broadcast_to(ln1_b_ref[...], (S_pad, D))
    ln2_g = jnp.broadcast_to(ln2_g_ref[...], (S_pad, D))
    ln2_b = jnp.broadcast_to(ln2_b_ref[...], (S_pad, D))
    bo = jnp.broadcast_to(bo_ref[...], (S_pad, D))
    b1 = jnp.broadcast_to(b1_ref[...], (S_pad, mlp))
    b2 = jnp.broadcast_to(b2_ref[...], (S_pad, D))
    # additive key mask: pad key columns get -1e30 before softmax
    key_bias = jnp.where(
        jax.lax.broadcasted_iota(jnp.int32, (1, S_pad), 1) < S,
        jnp.float32(0.0), jnp.float32(-1e30))

    # ---- patch embed + cls token + positional embed (one aligned matmul) ----
    x_ref[...] = (
        jnp.dot(patches_ref[0].astype(bf16), w_pe_ref[...],
                preferred_element_type=f32)
        + base_ref[...]
    )                                                        # (S_pad, D)

    # ---- encoder: `layers` iterations reusing the SAME weights --------------
    @pl.loop(0, layers, unroll=unroll)
    def _layer(_):
        x = x_ref[...]                                       # (S_pad, D) f32

        # attention block (pre-LN, single projection of width dq as in spec)
        h = _layernorm(x, ln1_g, ln1_b)
        qkv = jnp.dot(h.astype(bf16), wqkv,
                      preferred_element_type=f32).astype(bf16)  # (S_pad, 3*dq_pad)
        q = qkv[:, 0 * dq_pad:1 * dq_pad]                    # lane-aligned slices
        k = qkv[:, 1 * dq_pad:2 * dq_pad]
        v = qkv[:, 2 * dq_pad:3 * dq_pad]
        # q @ k^T via contraction on dq axis (scale already folded into Wq)
        logits = jax.lax.dot_general(
            q, k, (((1,), (1,)), ((), ())),
            preferred_element_type=f32) + key_bias           # (S_pad, S_pad)
        m = jnp.max(logits, axis=-1, keepdims=True)
        e = jnp.exp(logits - m)
        inv = pl.reciprocal(jnp.sum(e, axis=-1, keepdims=True), approx=True)
        att = (e * inv).astype(bf16)
        ctx = jnp.dot(att, v, preferred_element_type=f32)    # (S_pad, dq_pad)
        att_out = jnp.dot(ctx.astype(bf16), wo,
                          preferred_element_type=f32) + bo
        x1 = att_out + x                                     # residual

        # MLP block
        h2 = _layernorm(x1, ln2_g, ln2_b)
        z = jnp.dot(h2.astype(bf16), w1, preferred_element_type=f32) + b1
        z = _gelu_exact(z)
        z = jnp.dot(z.astype(bf16), w2, preferred_element_type=f32) + b2
        x_ref[...] = z + x1                                  # residual

    # ---- classification head on the cls row ---------------------------------
    cls_row = x_ref[0:1, :]                                  # (1, D)
    hh = _layernorm(cls_row, lnh_g_ref[...], lnh_b_ref[...])
    o_ref[0] = (
        jnp.dot(hh.astype(bf16), wh_ref[...], preferred_element_type=f32)
        + bh_ref[...]
    )                                                        # (1, C_pad)


# ---------------------------------------------------------------- wrapper ---
def vit_forward(x, params, *, patch_size, layers):
    B, C, H, W = x.shape
    hp, wp = H // patch_size, W // patch_size
    N = hp * wp
    Pf = C * patch_size * patch_size
    # einops Rearrange 'b c (h p1) (w p2) -> b (h w) (p1 p2 c)'  (pure glue)
    patches = (
        x.reshape(B, C, hp, patch_size, wp, patch_size)
        .transpose(0, 2, 4, 3, 5, 1)
        .reshape(B, N, Pf)
    )

    enc = params["enc"]
    D = params["w_pe"].shape[1]
    dq = enc["wq"].shape[1]
    mlp_dim = enc["w1"].shape[1]
    num_classes = params["w_h"].shape[1]
    S = N + 1
    S_pad = ((S + 7) // 8) * 8                      # sublane-aligned seq length
    dq_pad = ((dq + 127) // 128) * 128              # lane-aligned qkv width
    C_pad = ((num_classes + 127) // 128) * 128      # lane-dense output
    scale = float(dq) ** -0.5
    bf16 = jnp.bfloat16

    # Patches placed into their padded sequence slots (row 0 = cls slot, rows
    # S..S_pad-1 = pad) so the kernel does a single aligned matmul + add.
    patches_pad = jnp.zeros((B, S_pad, Pf), jnp.float32)
    patches_pad = patches_pad.at[:, 1:S, :].set(patches)

    # base = what is ADDED to (patches_pad @ W_pe), assembled host-side:
    #   row 0           : cls + pos[0]
    #   rows 1..S-1     : pos[i] + b_pe
    #   rows S..S_pad-1 : 0
    # NOTE: torch.concat does not broadcast (the reference only works for B=1);
    # the cls token is broadcast across the batch here (exact match for B=1).
    cls = params["cls"].reshape(1, D)
    pos = params["pos"].reshape(S, D)
    base = jnp.concatenate(
        [cls + pos[0:1, :],
         pos[1:S, :] + params["b_pe"],
         jnp.zeros((S_pad - S, D), jnp.float32)], axis=0)

    # Fused QKV weight: scale folded into Q (f32), lane-padded, cast to bf16.
    pad_c = lambda w, n: jnp.pad(w, ((0, 0), (0, n - w.shape[1])))
    wqkv = jnp.concatenate(
        [pad_c(enc["wq"] * scale, dq_pad),
         pad_c(enc["wk"], dq_pad),
         pad_c(enc["wv"], dq_pad)], axis=1).astype(bf16)       # (D, 3*dq_pad)
    wo = jnp.pad(enc["wo"], ((0, dq_pad - dq), (0, 0))).astype(bf16)
    w_pe = params["w_pe"].astype(bf16)
    w1 = enc["w1"].astype(bf16)
    w2 = enc["w2"].astype(bf16)
    w_h = pad_c(params["w_h"], C_pad).astype(bf16)
    b_h = pad_c(params["b_h"], C_pad)

    def const_spec(shape):
        nd = len(shape)
        return pl.BlockSpec(shape, lambda b, _nd=nd: (0,) * _nd)

    kern = functools.partial(
        _vit_kernel, S=S, S_pad=S_pad, D=D, dq_pad=dq_pad, layers=layers,
        unroll=(layers <= 4))

    out = pl.pallas_call(
        kern,
        out_shape=jax.ShapeDtypeStruct((B, 1, C_pad), jnp.float32),
        grid=(B,),
        in_specs=[
            pl.BlockSpec((1, S_pad, Pf), lambda b: (b, 0, 0)),
            const_spec((Pf, D)),
            const_spec((S_pad, D)),
            const_spec((1, D)), const_spec((1, D)),
            const_spec((D, 3 * dq_pad)),
            const_spec((dq_pad, D)), const_spec((1, D)),
            const_spec((1, D)), const_spec((1, D)),
            const_spec((D, mlp_dim)), const_spec((1, mlp_dim)),
            const_spec((mlp_dim, D)), const_spec((1, D)),
            const_spec((1, D)), const_spec((1, D)),
            const_spec((D, C_pad)), const_spec((1, C_pad)),
        ],
        out_specs=pl.BlockSpec((1, 1, C_pad), lambda b: (b, 0, 0)),
        scratch_shapes=[pltpu.VMEM((S_pad, D), jnp.float32)],
        compiler_params=pltpu.CompilerParams(
            dimension_semantics=("parallel",)),
    )(
        patches_pad,
        w_pe, base,
        enc["ln1_g"], enc["ln1_b"],
        wqkv,
        wo, enc["bo"],
        enc["ln2_g"], enc["ln2_b"],
        w1, enc["b1"], w2, enc["b2"],
        params["ln_h_g"], params["ln_h_b"],
        w_h, b_h,
    )
    return out[:, 0, :num_classes]


# ------------------------------------------------------------------ params ---
def init_params(key, *, c, patch_size, input_dim, heads, num_patches,
                mlp_dim, num_classes):
    pf = c * patch_size ** 2
    dq = input_dim // heads
    ks = jax.random.split(key, 16)
    n = lambda k, shp, s=0.05: (jax.random.normal(k, shp, jnp.float32) * s)
    return {
        "w_pe": n(ks[0], (pf, input_dim)),
        "b_pe": jnp.zeros((1, input_dim), jnp.float32),
        "cls": jax.random.uniform(ks[1], (1, 1, input_dim), jnp.float32),
        "pos": jax.random.uniform(ks[2], (1, num_patches + 1, input_dim),
                                  jnp.float32),
        "enc": {
            "ln1_g": jnp.ones((1, input_dim), jnp.float32),
            "ln1_b": jnp.zeros((1, input_dim), jnp.float32),
            "wq": n(ks[3], (input_dim, dq)),
            "wk": n(ks[4], (input_dim, dq)),
            "wv": n(ks[5], (input_dim, dq)),
            "wo": n(ks[6], (dq, input_dim)),
            "bo": jnp.zeros((1, input_dim), jnp.float32),
            "ln2_g": jnp.ones((1, input_dim), jnp.float32),
            "ln2_b": jnp.zeros((1, input_dim), jnp.float32),
            "w1": n(ks[7], (input_dim, mlp_dim)),
            "b1": jnp.zeros((1, mlp_dim), jnp.float32),
            "w2": n(ks[8], (mlp_dim, input_dim)),
            "b2": jnp.zeros((1, input_dim), jnp.float32),
        },
        "ln_h_g": jnp.ones((1, input_dim), jnp.float32),
        "ln_h_b": jnp.zeros((1, input_dim), jnp.float32),
        "w_h": n(ks[9], (input_dim, num_classes)),
        "b_h": jnp.zeros((1, num_classes), jnp.float32),
    }


# -------------------------------------------------------------------- main ---
if __name__ == "__main__":
    # Small ViT config implied by the module.
    B, C, H, W = 2, 4, 16, 16
    patch_size = 4
    input_dim = 32
    heads = 4
    num_patches = (H * W) // patch_size ** 2  # 16
    mlp_dim = 64
    layers = 2
    num_classes = 10

    key = jax.random.PRNGKey(0)
    k_x, k_p = jax.random.split(key)
    x = jax.random.normal(k_x, (B, C, H, W), jnp.float32)
    params = init_params(
        k_p, c=C, patch_size=patch_size, input_dim=input_dim, heads=heads,
        num_patches=num_patches, mlp_dim=mlp_dim, num_classes=num_classes,
    )

    fwd = jax.jit(functools.partial(vit_forward, patch_size=patch_size,
                                    layers=layers))
    out = fwd(x, params)
    jax.block_until_ready(out)
    assert out.shape == (B, num_classes), out.shape
    print("KERNEL_OK")
</pallas_src>

<mosaic_0001>
module attributes {stable_mosaic.version = 11 : i64} {
  func.func @_vit_kernel(%arg0: i32, %arg1: memref<1x24x64xf32, #tpu.memory_space<vmem>>, %arg2: memref<64x32xbf16, #tpu.memory_space<vmem>>, %arg3: memref<24x32xf32, #tpu.memory_space<vmem>>, %arg4: memref<1x32xf32, #tpu.memory_space<vmem>>, %arg5: memref<1x32xf32, #tpu.memory_space<vmem>>, %arg6: memref<32x384xbf16, #tpu.memory_space<vmem>>, %arg7: memref<128x32xbf16, #tpu.memory_space<vmem>>, %arg8: memref<1x32xf32, #tpu.memory_space<vmem>>, %arg9: memref<1x32xf32, #tpu.memory_space<vmem>>, %arg10: memref<1x32xf32, #tpu.memory_space<vmem>>, %arg11: memref<32x64xbf16, #tpu.memory_space<vmem>>, %arg12: memref<1x64xf32, #tpu.memory_space<vmem>>, %arg13: memref<64x32xbf16, #tpu.memory_space<vmem>>, %arg14: memref<1x32xf32, #tpu.memory_space<vmem>>, %arg15: memref<1x32xf32, #tpu.memory_space<vmem>>, %arg16: memref<1x32xf32, #tpu.memory_space<vmem>>, %arg17: memref<32x128xbf16, #tpu.memory_space<vmem>>, %arg18: memref<1x128xf32, #tpu.memory_space<vmem>>, %arg19: memref<1x1x128xf32, #tpu.memory_space<vmem>>, %arg20: memref<24x32xf32, #tpu.memory_space<vmem>>) attributes {dimension_semantics = [#tpu.dimension_semantics<parallel>], iteration_bounds = array<i64: 2>, scalar_prefetch = 0 : i64, scratch_operands = 1 : i64, tpu.core_type = #tpu.core_type<tc>, window_params = [{transform_indices = @transform_0, window_bounds = array<i64: 1, 24, 64>}, {pipeline_mode = #tpu.pipeline_mode<synchronous>, transform_indices = @transform_1, window_bounds = array<i64: 64, 32>}, {pipeline_mode = #tpu.pipeline_mode<synchronous>, transform_indices = @transform_2, window_bounds = array<i64: 24, 32>}, {pipeline_mode = #tpu.pipeline_mode<synchronous>, transform_indices = @transform_3, window_bounds = array<i64: 1, 32>}, {pipeline_mode = #tpu.pipeline_mode<synchronous>, transform_indices = @transform_4, window_bounds = array<i64: 1, 32>}, {pipeline_mode = #tpu.pipeline_mode<synchronous>, transform_indices = @transform_5, window_bounds = array<i64: 32, 384>}, {pipeline_mode = #tpu.pipeline_mode<synchronous>, transform_indices = @transform_6, window_bounds = array<i64: 128, 32>}, {pipeline_mode = #tpu.pipeline_mode<synchronous>, transform_indices = @transform_7, window_bounds = array<i64: 1, 32>}, {pipeline_mode = #tpu.pipeline_mode<synchronous>, transform_indices = @transform_8, window_bounds = array<i64: 1, 32>}, {pipeline_mode = #tpu.pipeline_mode<synchronous>, transform_indices = @transform_9, window_bounds = array<i64: 1, 32>}, {pipeline_mode = #tpu.pipeline_mode<synchronous>, transform_indices = @transform_10, window_bounds = array<i64: 32, 64>}, {pipeline_mode = #tpu.pipeline_mode<synchronous>, transform_indices = @transform_11, window_bounds = array<i64: 1, 64>}, {pipeline_mode = #tpu.pipeline_mode<synchronous>, transform_indices = @transform_12, window_bounds = array<i64: 64, 32>}, {pipeline_mode = #tpu.pipeline_mode<synchronous>, transform_indices = @transform_13, window_bounds = array<i64: 1, 32>}, {pipeline_mode = #tpu.pipeline_mode<synchronous>, transform_indices = @transform_14, window_bounds = array<i64: 1, 32>}, {pipeline_mode = #tpu.pipeline_mode<synchronous>, transform_indices = @transform_15, window_bounds = array<i64: 1, 32>}, {pipeline_mode = #tpu.pipeline_mode<synchronous>, transform_indices = @transform_16, window_bounds = array<i64: 32, 128>}, {pipeline_mode = #tpu.pipeline_mode<synchronous>, transform_indices = @transform_17, window_bounds = array<i64: 1, 128>}, {transform_indices = @transform_18, window_bounds = array<i64: 1, 1, 128>}]} {
    %c0 = arith.constant 0 : index
    %c0_0 = arith.constant 0 : index
    %0 = vector.load %arg6[%c0, %c0_0] : memref<32x384xbf16, #tpu.memory_space<vmem>>, vector<32x384xbf16>
    %c0_1 = arith.constant 0 : index
    %c0_2 = arith.constant 0 : index
    %1 = vector.load %arg7[%c0_1, %c0_2] : memref<128x32xbf16, #tpu.memory_space<vmem>>, vector<128x32xbf16>
    %c0_3 = arith.constant 0 : index
    %c0_4 = arith.constant 0 : index
    %2 = vector.load %arg11[%c0_3, %c0_4] : memref<32x64xbf16, #tpu.memory_space<vmem>>, vector<32x64xbf16>
    %c0_5 = arith.constant 0 : index
    %c0_6 = arith.constant 0 : index
    %3 = vector.load %arg13[%c0_5, %c0_6] : memref<64x32xbf16, #tpu.memory_space<vmem>>, vector<64x32xbf16>
    %c0_7 = arith.constant 0 : index
    %c0_8 = arith.constant 0 : index
    %4 = vector.load %arg4[%c0_7, %c0_8] : memref<1x32xf32, #tpu.memory_space<vmem>>, vector<1x32xf32>
    %5 = vector.shape_cast %4 : vector<1x32xf32> to vector<1x32xf32>
    %6 = vector.broadcast %5 : vector<1x32xf32> to vector<24x32xf32>
    %c0_9 = arith.constant 0 : index
    %c0_10 = arith.constant 0 : index
    %7 = vector.load %arg5[%c0_9, %c0_10] : memref<1x32xf32, #tpu.memory_space<vmem>>, vector<1x32xf32>
    %8 = vector.shape_cast %7 : vector<1x32xf32> to vector<1x32xf32>
    %9 = vector.broadcast %8 : vector<1x32xf32> to vector<24x32xf32>
    %c0_11 = arith.constant 0 : index
    %c0_12 = arith.constant 0 : index
    %10 = vector.load %arg9[%c0_11, %c0_12] : memref<1x32xf32, #tpu.memory_space<vmem>>, vector<1x32xf32>
    %11 = vector.shape_cast %10 : vector<1x32xf32> to vector<1x32xf32>
    %12 = vector.broadcast %11 : vector<1x32xf32> to vector<24x32xf32>
    %c0_13 = arith.constant 0 : index
    %c0_14 = arith.constant 0 : index
    %13 = vector.load %arg10[%c0_13, %c0_14] : memref<1x32xf32, #tpu.memory_space<vmem>>, vector<1x32xf32>
    %14 = vector.shape_cast %13 : vector<1x32xf32> to vector<1x32xf32>
    %15 = vector.broadcast %14 : vector<1x32xf32> to vector<24x32xf32>
    %c0_15 = arith.constant 0 : index
    %c0_16 = arith.constant 0 : index
    %16 = vector.load %arg8[%c0_15, %c0_16] : memref<1x32xf32, #tpu.memory_space<vmem>>, vector<1x32xf32>
    %17 = vector.shape_cast %16 : vector<1x32xf32> to vector<1x32xf32>
    %18 = vector.broadcast %17 : vector<1x32xf32> to vector<24x32xf32>
    %c0_17 = arith.constant 0 : index
    %c0_18 = arith.constant 0 : index
    %19 = vector.load %arg12[%c0_17, %c0_18] : memref<1x64xf32, #tpu.memory_space<vmem>>, vector<1x64xf32>
    %20 = vector.shape_cast %19 : vector<1x64xf32> to vector<1x64xf32>
    %21 = vector.broadcast %20 : vector<1x64xf32> to vector<24x64xf32>
    %c0_19 = arith.constant 0 : index
    %c0_20 = arith.constant 0 : index
    %22 = vector.load %arg14[%c0_19, %c0_20] : memref<1x32xf32, #tpu.memory_space<vmem>>, vector<1x32xf32>
    %23 = vector.shape_cast %22 : vector<1x32xf32> to vector<1x32xf32>
    %24 = vector.broadcast %23 : vector<1x32xf32> to vector<24x32xf32>
    %25 = tpu.iota {dimensions = array<i32: 1>} : vector<1x24xi32>
    %c17_i32 = arith.constant 17 : i32
    %26 = vector.broadcast %c17_i32 : i32 to vector<1x24xi32>
    %27 = arith.cmpi slt, %25, %26 : vector<1x24xi32>
    %cst = arith.constant 0.000000e+00 : f32
    %cst_21 = arith.constant -1.000000e+30 : f32
    %28 = vector.broadcast %cst : f32 to vector<1x24xf32>
    %29 = vector.broadcast %cst_21 : f32 to vector<1x24xf32>
    %30 = arith.select %27, %28, %29 : vector<1x24xi1>, vector<1x24xf32>
    %c0_22 = arith.constant 0 : index
    %c0_23 = arith.constant 0 : index
    %c0_24 = arith.constant 0 : index
    %31 = vector.load %arg1[%c0_22, %c0_23, %c0_24] : memref<1x24x64xf32, #tpu.memory_space<vmem>>, vector<1x24x64xf32>
    %32 = vector.shape_cast %31 : vector<1x24x64xf32> to vector<24x64xf32>
    %33 = arith.truncf %32 : vector<24x64xf32> to vector<24x64xbf16>
    %c0_25 = arith.constant 0 : index
    %c0_26 = arith.constant 0 : index
    %34 = vector.load %arg2[%c0_25, %c0_26] : memref<64x32xbf16, #tpu.memory_space<vmem>>, vector<64x32xbf16>
    %cst_27 = arith.constant dense<0.000000e+00> : vector<24x32xf32>
    %35 = tpu.matmul %33, %34, %cst_27 {dimension_numbers = #tpu.dot_dimension_numbers<[1], [0], [0], [1], [0, 0, 1, 1], [], []>} : vector<24x64xbf16>, vector<64x32xbf16>, vector<24x32xf32> -> vector<24x32xf32>
    %c0_28 = arith.constant 0 : index
    %c0_29 = arith.constant 0 : index
    %36 = vector.load %arg3[%c0_28, %c0_29] : memref<24x32xf32, #tpu.memory_space<vmem>>, vector<24x32xf32>
    %37 = arith.addf %35, %36 : vector<24x32xf32>
    %c0_30 = arith.constant 0 : index
    %c0_31 = arith.constant 0 : index
    %38 = vector.load %arg20[%c0_30, %c0_31] : memref<24x32xf32, #tpu.memory_space<vmem>>, vector<24x32xf32>
    tpu.vector_store %arg20[%c0_30, %c0_31], %37 {strides = array<i32>} : memref<24x32xf32, #tpu.memory_space<vmem>>, vector<24x32xf32>,
    %c0_i32 = arith.constant 0 : i32
    %c0_32 = arith.constant 0 : index
    %c0_33 = arith.constant 0 : index
    %39 = vector.load %arg20[%c0_32, %c0_33] : memref<24x32xf32, #tpu.memory_space<vmem>>, vector<24x32xf32>
    %cst_34 = arith.constant dense<0.000000e+00> : vector<24xf32>
    %40 = vector.multi_reduction <add>, %39, %cst_34 [1] : vector<24x32xf32> to vector<24xf32>
    %41 = vector.shape_cast %40 : vector<24xf32> to vector<24x1xf32>
    %cst_35 = arith.constant 3.200000e+01 : f32
    %42 = vector.broadcast %cst_35 : f32 to vector<24x1xf32>
    %43 = arith.divf %41, %42 : vector<24x1xf32>
    %44 = vector.broadcast %43 : vector<24x1xf32> to vector<24x32xf32>
    %45 = arith.subf %39, %44 : vector<24x32xf32>
    %46 = arith.mulf %45, %45 : vector<24x32xf32>
    %cst_36 = arith.constant dense<0.000000e+00> : vector<24xf32>
    %47 = vector.multi_reduction <add>, %46, %cst_36 [1] : vector<24x32xf32> to vector<24xf32>
    %48 = vector.shape_cast %47 : vector<24xf32> to vector<24x1xf32>
    %cst_37 = arith.constant 3.200000e+01 : f32
    %49 = vector.broadcast %cst_37 : f32 to vector<24x1xf32>
    %50 = arith.divf %48, %49 : vector<24x1xf32>
    %51 = vector.broadcast %43 : vector<24x1xf32> to vector<24x32xf32>
    %52 = arith.subf %39, %51 : vector<24x32xf32>
    %cst_38 = arith.constant 9.99999974E-6 : f32
    %53 = vector.broadcast %cst_38 : f32 to vector<24x1xf32>
    %54 = arith.addf %50, %53 : vector<24x1xf32>
    %55 = math.rsqrt %54 : vector<24x1xf32>
    %56 = vector.broadcast %55 : vector<24x1xf32> to vector<24x32xf32>
    %57 = arith.mulf %52, %56 : vector<24x32xf32>
    %58 = arith.mulf %57, %6 : vector<24x32xf32>
    %59 = arith.addf %58, %9 : vector<24x32xf32>
    %60 = arith.truncf %59 : vector<24x32xf32> to vector<24x32xbf16>
    %cst_39 = arith.constant dense<0.000000e+00> : vector<24x384xf32>
    %61 = tpu.matmul %60, %0, %cst_39 {dimension_numbers = #tpu.dot_dimension_numbers<[1], [0], [0], [1], [0, 0, 1, 1], [], []>} : vector<24x32xbf16>, vector<32x384xbf16>, vector<24x384xf32> -> vector<24x384xf32>
    %62 = arith.truncf %61 : vector<24x384xf32> to vector<24x384xbf16>
    %63 = vector.extract_strided_slice %62 {offsets = [0, 0], sizes = [24, 128], strides = [1, 1]} : vector<24x384xbf16> to vector<24x128xbf16>
    %64 = vector.extract_strided_slice %62 {offsets = [0, 128], sizes = [24, 128], strides = [1, 1]} : vector<24x384xbf16> to vector<24x128xbf16>
    %65 = vector.extract_strided_slice %62 {offsets = [0, 256], sizes = [24, 128], strides = [1, 1]} : vector<24x384xbf16> to vector<24x128xbf16>
    %cst_40 = arith.constant dense<0.000000e+00> : vector<24x24xf32>
    %66 = tpu.matmul %63, %64, %cst_40 {dimension_numbers = #tpu.dot_dimension_numbers<[1], [1], [0], [0], [0, 0, 1, 0], [], []>} : vector<24x128xbf16>, vector<24x128xbf16>, vector<24x24xf32> -> vector<24x24xf32>
    %67 = vector.broadcast %30 : vector<1x24xf32> to vector<24x24xf32>
    %68 = arith.addf %66, %67 : vector<24x24xf32>
    %cst_41 = arith.constant dense<0xFF800000> : vector<24xf32>
    %69 = vector.multi_reduction <maximumf>, %68, %cst_41 [1] : vector<24x24xf32> to vector<24xf32>
    %70 = vector.shape_cast %69 : vector<24xf32> to vector<24x1xf32>
    %71 = vector.broadcast %70 : vector<24x1xf32> to vector<24x24xf32>
    %72 = arith.subf %68, %71 : vector<24x24xf32>
    %73 = math.exp %72 : vector<24x24xf32>
    %cst_42 = arith.constant dense<0.000000e+00> : vector<24xf32>
    %74 = vector.multi_reduction <add>, %73, %cst_42 [1] : vector<24x24xf32> to vector<24xf32>
    %75 = vector.shape_cast %74 : vector<24xf32> to vector<24x1xf32>
    %76 = tpu.reciprocal %75 {approx = true} : vector<24x1xf32> -> vector<24x1xf32>
    %77 = vector.broadcast %76 : vector<24x1xf32> to vector<24x24xf32>
    %78 = arith.mulf %73, %77 : vector<24x24xf32>
    %79 = arith.truncf %78 : vector<24x24xf32> to vector<24x24xbf16>
    %cst_43 = arith.constant dense<0.000000e+00> : vector<24x128xf32>
    %80 = tpu.matmul %79, %65, %cst_43 {dimension_numbers = #tpu.dot_dimension_numbers<[1], [0], [0], [1], [0, 0, 1, 1], [], []>} : vector<24x24xbf16>, vector<24x128xbf16>, vector<24x128xf32> -> vector<24x128xf32>
    %81 = arith.truncf %80 : vector<24x128xf32> to vector<24x128xbf16>
    %cst_44 = arith.constant dense<0.000000e+00> : vector<24x32xf32>
    %82 = tpu.matmul %81, %1, %cst_44 {dimension_numbers = #tpu.dot_dimension_numbers<[1], [0], [0], [1], [0, 0, 1, 1], [], []>} : vector<24x128xbf16>, vector<128x32xbf16>, vector<24x32xf32> -> vector<24x32xf32>
    %83 = arith.addf %82, %18 : vector<24x32xf32>
    %84 = arith.addf %83, %39 : vector<24x32xf32>
    %cst_45 = arith.constant dense<0.000000e+00> : vector<24xf32>
    %85 = vector.multi_reduction <add>, %84, %cst_45 [1] : vector<24x32xf32> to vector<24xf32>
    %86 = vector.shape_cast %85 : vector<24xf32> to vector<24x1xf32>
    %cst_46 = arith.constant 3.200000e+01 : f32
    %87 = vector.broadcast %cst_46 : f32 to vector<24x1xf32>
    %88 = arith.divf %86, %87 : vector<24x1xf32>
    %89 = vector.broadcast %88 : vector<24x1xf32> to vector<24x32xf32>
    %90 = arith.subf %84, %89 : vector<24x32xf32>
    %91 = arith.mulf %90, %90 : vector<24x32xf32>
    %cst_47 = arith.constant dense<0.000000e+00> : vector<24xf32>
    %92 = vector.multi_reduction <add>, %91, %cst_47 [1] : vector<24x32xf32> to vector<24xf32>
    %93 = vector.shape_cast %92 : vector<24xf32> to vector<24x1xf32>
    %cst_48 = arith.constant 3.200000e+01 : f32
    %94 = vector.broadcast %cst_48 : f32 to vector<24x1xf32>
    %95 = arith.divf %93, %94 : vector<24x1xf32>
    %96 = vector.broadcast %88 : vector<24x1xf32> to vector<24x32xf32>
    %97 = arith.subf %84, %96 : vector<24x32xf32>
    %cst_49 = arith.constant 9.99999974E-6 : f32
    %98 = vector.broadcast %cst_49 : f32 to vector<24x1xf32>
    %99 = arith.addf %95, %98 : vector<24x1xf32>
    %100 = math.rsqrt %99 : vector<24x1xf32>
    %101 = vector.broadcast %100 : vector<24x1xf32> to vector<24x32xf32>
    %102 = arith.mulf %97, %101 : vector<24x32xf32>
    %103 = arith.mulf %102, %12 : vector<24x32xf32>
    %104 = arith.addf %103, %15 : vector<24x32xf32>
    %105 = arith.truncf %104 : vector<24x32xf32> to vector<24x32xbf16>
    %cst_50 = arith.constant dense<0.000000e+00> : vector<24x64xf32>
    %106 = tpu.matmul %105, %2, %cst_50 {dimension_numbers = #tpu.dot_dimension_numbers<[1], [0], [0], [1], [0, 0, 1, 1], [], []>} : vector<24x32xbf16>, vector<32x64xbf16>, vector<24x64xf32> -> vector<24x64xf32>
    %107 = arith.addf %106, %21 : vector<24x64xf32>
    %cst_51 = arith.constant 5.000000e-01 : f32
    %108 = vector.broadcast %cst_51 : f32 to vector<24x64xf32>
    %109 = arith.mulf %108, %107 : vector<24x64xf32>
    %cst_52 = arith.constant 0.707106769 : f32
    %110 = vector.broadcast %cst_52 : f32 to vector<24x64xf32>
    %111 = arith.mulf %107, %110 : vector<24x64xf32>
    %112 = math.erf %111 : vector<24x64xf32>
    %cst_53 = arith.constant 1.000000e+00 : f32
    %113 = vector.broadcast %cst_53 : f32 to vector<24x64xf32>
    %114 = arith.addf %113, %112 : vector<24x64xf32>
    %115 = arith.mulf %109, %114 : vector<24x64xf32>
    %116 = arith.truncf %115 : vector<24x64xf32> to vector<24x64xbf16>
    %cst_54 = arith.constant dense<0.000000e+00> : vector<24x32xf32>
    %117 = tpu.matmul %116, %3, %cst_54 {dimension_numbers = #tpu.dot_dimension_numbers<[1], [0], [0], [1], [0, 0, 1, 1], [], []>} : vector<24x64xbf16>, vector<64x32xbf16>, vector<24x32xf32> -> vector<24x32xf32>
    %118 = arith.addf %117, %24 : vector<24x32xf32>
    %119 = arith.addf %118, %84 : vector<24x32xf32>
    %c0_55 = arith.constant 0 : index
    %c0_56 = arith.constant 0 : index
    %120 = vector.load %arg20[%c0_55, %c0_56] : memref<24x32xf32, #tpu.memory_space<vmem>>, vector<24x32xf32>
    tpu.vector_store %arg20[%c0_55, %c0_56], %119 {strides = array<i32>} : memref<24x32xf32, #tpu.memory_space<vmem>>, vector<24x32xf32>,
    %c1_i32 = arith.constant 1 : i32
    %c0_57 = arith.constant 0 : index
    %c0_58 = arith.constant 0 : index
    %121 = vector.load %arg20[%c0_57, %c0_58] : memref<24x32xf32, #tpu.memory_space<vmem>>, vector<24x32xf32>
    %cst_59 = arith.constant dense<0.000000e+00> : vector<24xf32>
    %122 = vector.multi_reduction <add>, %121, %cst_59 [1] : vector<24x32xf32> to vector<24xf32>
    %123 = vector.shape_cast %122 : vector<24xf32> to vector<24x1xf32>
    %cst_60 = arith.constant 3.200000e+01 : f32
    %124 = vector.broadcast %cst_60 : f32 to vector<24x1xf32>
    %125 = arith.divf %123, %124 : vector<24x1xf32>
    %126 = vector.broadcast %125 : vector<24x1xf32> to vector<24x32xf32>
    %127 = arith.subf %121, %126 : vector<24x32xf32>
    %128 = arith.mulf %127, %127 : vector<24x32xf32>
    %cst_61 = arith.constant dense<0.000000e+00> : vector<24xf32>
    %129 = vector.multi_reduction <add>, %128, %cst_61 [1] : vector<24x32xf32> to vector<24xf32>
    %130 = vector.shape_cast %129 : vector<24xf32> to vector<24x1xf32>
    %cst_62 = arith.constant 3.200000e+01 : f32
    %131 = vector.broadcast %cst_62 : f32 to vector<24x1xf32>
    %132 = arith.divf %130, %131 : vector<24x1xf32>
    %133 = vector.broadcast %125 : vector<24x1xf32> to vector<24x32xf32>
    %134 = arith.subf %121, %133 : vector<24x32xf32>
    %cst_63 = arith.constant 9.99999974E-6 : f32
    %135 = vector.broadcast %cst_63 : f32 to vector<24x1xf32>
    %136 = arith.addf %132, %135 : vector<24x1xf32>
    %137 = math.rsqrt %136 : vector<24x1xf32>
    %138 = vector.broadcast %137 : vector<24x1xf32> to vector<24x32xf32>
    %139 = arith.mulf %134, %138 : vector<24x32xf32>
    %140 = arith.mulf %139, %6 : vector<24x32xf32>
    %141 = arith.addf %140, %9 : vector<24x32xf32>
    %142 = arith.truncf %141 : vector<24x32xf32> to vector<24x32xbf16>
    %cst_64 = arith.constant dense<0.000000e+00> : vector<24x384xf32>
    %143 = tpu.matmul %142, %0, %cst_64 {dimension_numbers = #tpu.dot_dimension_numbers<[1], [0], [0], [1], [0, 0, 1, 1], [], []>} : vector<24x32xbf16>, vector<32x384xbf16>, vector<24x384xf32> -> vector<24x384xf32>
    %144 = arith.truncf %143 : vector<24x384xf32> to vector<24x384xbf16>
    %145 = vector.extract_strided_slice %144 {offsets = [0, 0], sizes = [24, 128], strides = [1, 1]} : vector<24x384xbf16> to vector<24x128xbf16>
    %146 = vector.extract_strided_slice %144 {offsets = [0, 128], sizes = [24, 128], strides = [1, 1]} : vector<24x384xbf16> to vector<24x128xbf16>
    %147 = vector.extract_strided_slice %144 {offsets = [0, 256], sizes = [24, 128], strides = [1, 1]} : vector<24x384xbf16> to vector<24x128xbf16>
    %cst_65 = arith.constant dense<0.000000e+00> : vector<24x24xf32>
    %148 = tpu.matmul %145, %146, %cst_65 {dimension_numbers = #tpu.dot_dimension_numbers<[1], [1], [0], [0], [0, 0, 1, 0], [], []>} : vector<24x128xbf16>, vector<24x128xbf16>, vector<24x24xf32> -> vector<24x24xf32>
    %149 = vector.broadcast %30 : vector<1x24xf32> to vector<24x24xf32>
    %150 = arith.addf %148, %149 : vector<24x24xf32>
    %cst_66 = arith.constant dense<0xFF800000> : vector<24xf32>
    %151 = vector.multi_reduction <maximumf>, %150, %cst_66 [1] : vector<24x24xf32> to vector<24xf32>
    %152 = vector.shape_cast %151 : vector<24xf32> to vector<24x1xf32>
    %153 = vector.broadcast %152 : vector<24x1xf32> to vector<24x24xf32>
    %154 = arith.subf %150, %153 : vector<24x24xf32>
    %155 = math.exp %154 : vector<24x24xf32>
    %cst_67 = arith.constant dense<0.000000e+00> : vector<24xf32>
    %156 = vector.multi_reduction <add>, %155, %cst_67 [1] : vector<24x24xf32> to vector<24xf32>
    %157 = vector.shape_cast %156 : vector<24xf32> to vector<24x1xf32>
    %158 = tpu.reciprocal %157 {approx = true} : vector<24x1xf32> -> vector<24x1xf32>
    %159 = vector.broadcast %158 : vector<24x1xf32> to vector<24x24xf32>
    %160 = arith.mulf %155, %159 : vector<24x24xf32>
    %161 = arith.truncf %160 : vector<24x24xf32> to vector<24x24xbf16>
    %cst_68 = arith.constant dense<0.000000e+00> : vector<24x128xf32>
    %162 = tpu.matmul %161, %147, %cst_68 {dimension_numbers = #tpu.dot_dimension_numbers<[1], [0], [0], [1], [0, 0, 1, 1], [], []>} : vector<24x24xbf16>, vector<24x128xbf16>, vector<24x128xf32> -> vector<24x128xf32>
    %163 = arith.truncf %162 : vector<24x128xf32> to vector<24x128xbf16>
    %cst_69 = arith.constant dense<0.000000e+00> : vector<24x32xf32>
    %164 = tpu.matmul %163, %1, %cst_69 {dimension_numbers = #tpu.dot_dimension_numbers<[1], [0], [0], [1], [0, 0, 1, 1], [], []>} : vector<24x128xbf16>, vector<128x32xbf16>, vector<24x32xf32> -> vector<24x32xf32>
    %165 = arith.addf %164, %18 : vector<24x32xf32>
    %166 = arith.addf %165, %121 : vector<24x32xf32>
    %cst_70 = arith.constant dense<0.000000e+00> : vector<24xf32>
    %167 = vector.multi_reduction <add>, %166, %cst_70 [1] : vector<24x32xf32> to vector<24xf32>
    %168 = vector.shape_cast %167 : vector<24xf32> to vector<24x1xf32>
    %cst_71 = arith.constant 3.200000e+01 : f32
    %169 = vector.broadcast %cst_71 : f32 to vector<24x1xf32>
    %170 = arith.divf %168, %169 : vector<24x1xf32>
    %171 = vector.broadcast %170 : vector<24x1xf32> to vector<24x32xf32>
    %172 = arith.subf %166, %171 : vector<24x32xf32>
    %173 = arith.mulf %172, %172 : vector<24x32xf32>
    %cst_72 = arith.constant dense<0.000000e+00> : vector<24xf32>
    %174 = vector.multi_reduction <add>, %173, %cst_72 [1] : vector<24x32xf32> to vector<24xf32>
    %175 = vector.shape_cast %174 : vector<24xf32> to vector<24x1xf32>
    %cst_73 = arith.constant 3.200000e+01 : f32
    %176 = vector.broadcast %cst_73 : f32 to vector<24x1xf32>
    %177 = arith.divf %175, %176 : vector<24x1xf32>
    %178 = vector.broadcast %170 : vector<24x1xf32> to vector<24x32xf32>
    %179 = arith.subf %166, %178 : vector<24x32xf32>
    %cst_74 = arith.constant 9.99999974E-6 : f32
    %180 = vector.broadcast %cst_74 : f32 to vector<24x1xf32>
    %181 = arith.addf %177, %180 : vector<24x1xf32>
    %182 = math.rsqrt %181 : vector<24x1xf32>
    %183 = vector.broadcast %182 : vector<24x1xf32> to vector<24x32xf32>
    %184 = arith.mulf %179, %183 : vector<24x32xf32>
    %185 = arith.mulf %184, %12 : vector<24x32xf32>
    %186 = arith.addf %185, %15 : vector<24x32xf32>
    %187 = arith.truncf %186 : vector<24x32xf32> to vector<24x32xbf16>
    %cst_75 = arith.constant dense<0.000000e+00> : vector<24x64xf32>
    %188 = tpu.matmul %187, %2, %cst_75 {dimension_numbers = #tpu.dot_dimension_numbers<[1], [0], [0], [1], [0, 0, 1, 1], [], []>} : vector<24x32xbf16>, vector<32x64xbf16>, vector<24x64xf32> -> vector<24x64xf32>
    %189 = arith.addf %188, %21 : vector<24x64xf32>
    %cst_76 = arith.constant 5.000000e-01 : f32
    %190 = vector.broadcast %cst_76 : f32 to vector<24x64xf32>
    %191 = arith.mulf %190, %189 : vector<24x64xf32>
    %cst_77 = arith.constant 0.707106769 : f32
    %192 = vector.broadcast %cst_77 : f32 to vector<24x64xf32>
    %193 = arith.mulf %189, %192 : vector<24x64xf32>
    %194 = math.erf %193 : vector<24x64xf32>
    %cst_78 = arith.constant 1.000000e+00 : f32
    %195 = vector.broadcast %cst_78 : f32 to vector<24x64xf32>
    %196 = arith.addf %195, %194 : vector<24x64xf32>
    %197 = arith.mulf %191, %196 : vector<24x64xf32>
    %198 = arith.truncf %197 : vector<24x64xf32> to vector<24x64xbf16>
    %cst_79 = arith.constant dense<0.000000e+00> : vector<24x32xf32>
    %199 = tpu.matmul %198, %3, %cst_79 {dimension_numbers = #tpu.dot_dimension_numbers<[1], [0], [0], [1], [0, 0, 1, 1], [], []>} : vector<24x64xbf16>, vector<64x32xbf16>, vector<24x32xf32> -> vector<24x32xf32>
    %200 = arith.addf %199, %24 : vector<24x32xf32>
    %201 = arith.addf %200, %166 : vector<24x32xf32>
    %c0_80 = arith.constant 0 : index
    %c0_81 = arith.constant 0 : index
    %202 = vector.load %arg20[%c0_80, %c0_81] : memref<24x32xf32, #tpu.memory_space<vmem>>, vector<24x32xf32>
    tpu.vector_store %arg20[%c0_80, %c0_81], %201 {strides = array<i32>} : memref<24x32xf32, #tpu.memory_space<vmem>>, vector<24x32xf32>,
    %c0_82 = arith.constant 0 : index
    %c0_83 = arith.constant 0 : index
    %203 = vector.load %arg20[%c0_82, %c0_83] : memref<24x32xf32, #tpu.memory_space<vmem>>, vector<1x32xf32>
    %c0_84 = arith.constant 0 : index
    %c0_85 = arith.constant 0 : index
    %204 = vector.load %arg15[%c0_84, %c0_85] : memref<1x32xf32, #tpu.memory_space<vmem>>, vector<1x32xf32>
    %c0_86 = arith.constant 0 : index
    %c0_87 = arith.constant 0 : index
    %205 = vector.load %arg16[%c0_86, %c0_87] : memref<1x32xf32, #tpu.memory_space<vmem>>, vector<1x32xf32>
    %cst_88 = arith.constant dense<0.000000e+00> : vector<1xf32>
    %206 = vector.multi_reduction <add>, %203, %cst_88 [1] : vector<1x32xf32> to vector<1xf32>
    %207 = vector.shape_cast %206 : vector<1xf32> to vector<1x1xf32>
    %cst_89 = arith.constant 3.200000e+01 : f32
    %208 = vector.broadcast %cst_89 : f32 to vector<1x1xf32>
    %209 = arith.divf %207, %208 : vector<1x1xf32>
    %210 = vector.broadcast %209 : vector<1x1xf32> to vector<1x32xf32>
    %211 = arith.subf %203, %210 : vector<1x32xf32>
    %212 = arith.mulf %211, %211 : vector<1x32xf32>
    %cst_90 = arith.constant dense<0.000000e+00> : vector<1xf32>
    %213 = vector.multi_reduction <add>, %212, %cst_90 [1] : vector<1x32xf32> to vector<1xf32>
    %214 = vector.shape_cast %213 : vector<1xf32> to vector<1x1xf32>
    %cst_91 = arith.constant 3.200000e+01 : f32
    %215 = vector.broadcast %cst_91 : f32 to vector<1x1xf32>
    %216 = arith.divf %214, %215 : vector<1x1xf32>
    %217 = vector.broadcast %209 : vector<1x1xf32> to vector<1x32xf32>
    %218 = arith.subf %203, %217 : vector<1x32xf32>
    %cst_92 = arith.constant 9.99999974E-6 : f32
    %219 = vector.broadcast %cst_92 : f32 to vector<1x1xf32>
    %220 = arith.addf %216, %219 : vector<1x1xf32>
    %221 = math.rsqrt %220 : vector<1x1xf32>
    %222 = vector.broadcast %221 : vector<1x1xf32> to vector<1x32xf32>
    %223 = arith.mulf %218, %222 : vector<1x32xf32>
    %224 = arith.mulf %223, %204 : vector<1x32xf32>
    %225 = arith.addf %224, %205 : vector<1x32xf32>
    %226 = arith.truncf %225 : vector<1x32xf32> to vector<1x32xbf16>
    %c0_93 = arith.constant 0 : index
    %c0_94 = arith.constant 0 : index
    %227 = vector.load %arg17[%c0_93, %c0_94] : memref<32x128xbf16, #tpu.memory_space<vmem>>, vector<32x128xbf16>
    %cst_95 = arith.constant dense<0.000000e+00> : vector<1x128xf32>
    %228 = tpu.matmul %226, %227, %cst_95 {dimension_numbers = #tpu.dot_dimension_numbers<[1], [0], [0], [1], [0, 0, 1, 1], [], []>} : vector<1x32xbf16>, vector<32x128xbf16>, vector<1x128xf32> -> vector<1x128xf32>
    %c0_96 = arith.constant 0 : index
    %c0_97 = arith.constant 0 : index
    %229 = vector.load %arg18[%c0_96, %c0_97] : memref<1x128xf32, #tpu.memory_space<vmem>>, vector<1x128xf32>
    %230 = arith.addf %228, %229 : vector<1x128xf32>
    %c0_98 = arith.constant 0 : index
    %c0_99 = arith.constant 0 : index
    %c0_100 = arith.constant 0 : index
    %231 = vector.load %arg19[%c0_98, %c0_99, %c0_100] : memref<1x1x128xf32, #tpu.memory_space<vmem>>, vector<1x1x128xf32>
    %232 = vector.shape_cast %231 : vector<1x1x128xf32> to vector<1x128xf32>
    %233 = vector.shape_cast %230 : vector<1x128xf32> to vector<1x1x128xf32>
    tpu.vector_store %arg19[%c0_98, %c0_99, %c0_100], %233 {strides = array<i32>} : memref<1x1x128xf32, #tpu.memory_space<vmem>>, vector<1x1x128xf32>,
    return
  }
  func.func @transform_0(%arg0: i32) -> (i32, i32, i32) {
    %c0_i32 = arith.constant 0 : i32
    %c0_i32_0 = arith.constant 0 : i32
    %c0_i32_1 = arith.constant 0 : i32
    return %arg0, %c0_i32, %c0_i32_0 : i32, i32, i32
  }
  func.func @transform_1(%arg0: i32) -> (i32, i32) {
    %c0_i32 = arith.constant 0 : i32
    %c0_i32_0 = arith.constant 0 : i32
    %c0_i32_1 = arith.constant 0 : i32
    return %c0_i32, %c0_i32_0 : i32, i32
  }
  func.func @transform_2(%arg0: i32) -> (i32, i32) {
    %c0_i32 = arith.constant 0 : i32
    %c0_i32_0 = arith.constant 0 : i32
    %c0_i32_1 = arith.constant 0 : i32
    return %c0_i32, %c0_i32_0 : i32, i32
  }
  func.func @transform_3(%arg0: i32) -> (i32, i32) {
    %c0_i32 = arith.constant 0 : i32
    %c0_i32_0 = arith.constant 0 : i32
    %c0_i32_1 = arith.constant 0 : i32
    return %c0_i32, %c0_i32_0 : i32, i32
  }
  func.func @transform_4(%arg0: i32) -> (i32, i32) {
    %c0_i32 = arith.constant 0 : i32
    %c0_i32_0 = arith.constant 0 : i32
    %c0_i32_1 = arith.constant 0 : i32
    return %c0_i32, %c0_i32_0 : i32, i32
  }
  func.func @transform_5(%arg0: i32) -> (i32, i32) {
    %c0_i32 = arith.constant 0 : i32
    %c0_i32_0 = arith.constant 0 : i32
    %c0_i32_1 = arith.constant 0 : i32
    return %c0_i32, %c0_i32_0 : i32, i32
  }
  func.func @transform_6(%arg0: i32) -> (i32, i32) {
    %c0_i32 = arith.constant 0 : i32
    %c0_i32_0 = arith.constant 0 : i32
    %c0_i32_1 = arith.constant 0 : i32
    return %c0_i32, %c0_i32_0 : i32, i32
  }
  func.func @transform_7(%arg0: i32) -> (i32, i32) {
    %c0_i32 = arith.constant 0 : i32
    %c0_i32_0 = arith.constant 0 : i32
    %c0_i32_1 = arith.constant 0 : i32
    return %c0_i32, %c0_i32_0 : i32, i32
  }
  func.func @transform_8(%arg0: i32) -> (i32, i32) {
    %c0_i32 = arith.constant 0 : i32
    %c0_i32_0 = arith.constant 0 : i32
    %c0_i32_1 = arith.constant 0 : i32
    return %c0_i32, %c0_i32_0 : i32, i32
  }
  func.func @transform_9(%arg0: i32) -> (i32, i32) {
    %c0_i32 = arith.constant 0 : i32
    %c0_i32_0 = arith.constant 0 : i32
    %c0_i32_1 = arith.constant 0 : i32
    return %c0_i32, %c0_i32_0 : i32, i32
  }
  func.func @transform_10(%arg0: i32) -> (i32, i32) {
    %c0_i32 = arith.constant 0 : i32
    %c0_i32_0 = arith.constant 0 : i32
    %c0_i32_1 = arith.constant 0 : i32
    return %c0_i32, %c0_i32_0 : i32, i32
  }
  func.func @transform_11(%arg0: i32) -> (i32, i32) {
    %c0_i32 = arith.constant 0 : i32
    %c0_i32_0 = arith.constant 0 : i32
    %c0_i32_1 = arith.constant 0 : i32
    return %c0_i32, %c0_i32_0 : i32, i32
  }
  func.func @transform_12(%arg0: i32) -> (i32, i32) {
    %c0_i32 = arith.constant 0 : i32
    %c0_i32_0 = arith.constant 0 : i32
    %c0_i32_1 = arith.constant 0 : i32
    return %c0_i32, %c0_i32_0 : i32, i32
  }
  func.func @transform_13(%arg0: i32) -> (i32, i32) {
    %c0_i32 = arith.constant 0 : i32
    %c0_i32_0 = arith.constant 0 : i32
    %c0_i32_1 = arith.constant 0 : i32
    return %c0_i32, %c0_i32_0 : i32, i32
  }
  func.func @transform_14(%arg0: i32) -> (i32, i32) {
    %c0_i32 = arith.constant 0 : i32
    %c0_i32_0 = arith.constant 0 : i32
    %c0_i32_1 = arith.constant 0 : i32
    return %c0_i32, %c0_i32_0 : i32, i32
  }
  func.func @transform_15(%arg0: i32) -> (i32, i32) {
    %c0_i32 = arith.constant 0 : i32
    %c0_i32_0 = arith.constant 0 : i32
    %c0_i32_1 = arith.constant 0 : i32
    return %c0_i32, %c0_i32_0 : i32, i32
  }
  func.func @transform_16(%arg0: i32) -> (i32, i32) {
    %c0_i32 = arith.constant 0 : i32
    %c0_i32_0 = arith.constant 0 : i32
    %c0_i32_1 = arith.constant 0 : i32
    return %c0_i32, %c0_i32_0 : i32, i32
  }
  func.func @transform_17(%arg0: i32) -> (i32, i32) {
    %c0_i32 = arith.constant 0 : i32
    %c0_i32_0 = arith.constant 0 : i32
    %c0_i32_1 = arith.constant 0 : i32
    return %c0_i32, %c0_i32_0 : i32, i32
  }
  func.func @transform_18(%arg0: i32) -> (i32, i32, i32) {
    %c0_i32 = arith.constant 0 : i32
    %c0_i32_0 = arith.constant 0 : i32
    %c0_i32_1 = arith.constant 0 : i32
    return %arg0, %c0_i32, %c0_i32_0 : i32, i32, i32
  }
}

</mosaic_0001>

<llo_original>
// kernel: vit_forward.1
$region0: #{vit_forward.1}
  #allocation0 [shape = 'u32[]', space=smem, size = 0x4, offset = 0x4, fixed_abs, tag = 'smem constant byte address 0x4 - core index']
  #allocation1 [shape = 'u32[144,128]{1,0:T(1,128)}', space=vmem, size = 0x12000, scoped, tag = 'internal scratch']
  #allocation2 [shape = 'f32[24,32]{1,0:T(8,128)}', space=vmem, size = 0x3000, scoped, tag = 'scratch operand']
  %s0 = inlined_call_operand.vmem [shape: f32[2,24,64], index: 0, kind: input, shape index: {}]
  %s1 = inlined_call_operand.vmem [shape: bf16[64,32], index: 1, kind: input, shape index: {}]
  %s2 = inlined_call_operand.vmem [shape: f32[24,32], index: 2, kind: input, shape index: {}]
  %s3 = inlined_call_operand.vmem [shape: f32[1,32], index: 3, kind: input, shape index: {}]
  %s4 = inlined_call_operand.vmem [shape: f32[1,32], index: 4, kind: input, shape index: {}]
  %s5 = inlined_call_operand.vmem [shape: bf16[32,384], index: 5, kind: input, shape index: {}]
  %s6 = inlined_call_operand.vmem [shape: bf16[128,32], index: 6, kind: input, shape index: {}]
  %s7 = inlined_call_operand.vmem [shape: f32[1,32], index: 7, kind: input, shape index: {}]
  %s8 = inlined_call_operand.vmem [shape: f32[1,32], index: 8, kind: input, shape index: {}]
  %s9 = inlined_call_operand.vmem [shape: f32[1,32], index: 9, kind: input, shape index: {}]
  %s10 = inlined_call_operand.vmem [shape: bf16[32,64], index: 10, kind: input, shape index: {}]
  %s11 = inlined_call_operand.vmem [shape: f32[1,64], index: 11, kind: input, shape index: {}]
  %s12 = inlined_call_operand.vmem [shape: bf16[64,32], index: 12, kind: input, shape index: {}]
  %s13 = inlined_call_operand.vmem [shape: f32[1,32], index: 13, kind: input, shape index: {}]
  %s14 = inlined_call_operand.vmem [shape: f32[1,32], index: 14, kind: input, shape index: {}]
  %s15 = inlined_call_operand.vmem [shape: f32[1,32], index: 15, kind: input, shape index: {}]
  %s16 = inlined_call_operand.vmem [shape: bf16[32,128], index: 16, kind: input, shape index: {}]
  %s17 = inlined_call_operand.vmem [shape: f32[1,128], index: 17, kind: input, shape index: {}]
  %s18 = inlined_call_operand.hbm [shape: f32[2,1,128], index: 18, kind: output, shape index: {}]
  %s19 = sld [smem:[#allocation0]]
  $region105: #{vit_forward.1} parent=0
    _
  %s21 = ssub.s32 1, %s19
  %s22 = scalar_select 0, %s21, %s19
  $region1: #{vit_forward.1} parent=0
    #allocation3 [shape = 'u8[1024]{0}', space=vmem, size = 0x400, scoped, tag = 'output window, operand 0']
    #allocation4 [shape = 's32[2]{0}', space=sflag, size = 0x8, scoped, tag = 'scoped memory for vit_forward.1']
    %23 = vsyncpa [#allocation4], 0
    %s24 = scalar_lea.sflag [#allocation4], 1
    %25 = vsyncpa %s24, 0
    loop: start=0, step=1, limit=4
    $region2: #{vit_forward.1} parent=1 // loop_pre_header
      _
    $region3: #{vit_forward.1} parent=1 // loop_header
      %s27 = sphi 0, %s31
      %p28 = scmp.ge.s32.totalorder %s27, 4
      %s37 = sphi 0, %s39
      %s40 = sphi 0, %s37
      %s41 = sphi 0, %s40
      %s57 = sphi 0, %s41
      %s61 = sphi 0, %s61
      %s63 = sphi 0, %s61
      %s64 = sphi 0, %s63
      %s78 = sphi 0, %s64
      %s82 = sphi 0, %s82
      %s84 = sphi 0, %s82
      %s85 = sphi 0, %s84
      %s99 = sphi 0, %s85
      %s103 = sphi 0, %s103
      %s105 = sphi 0, %s103
      %s106 = sphi 0, %s105
      %s120 = sphi 0, %s106
      %s124 = sphi 0, %s124
      %s126 = sphi 0, %s124
      %s127 = sphi 0, %s126
      %s141 = sphi 0, %s127
      %s145 = sphi 0, %s145
      %s147 = sphi 0, %s145
      %s148 = sphi 0, %s147
      %s162 = sphi 0, %s148
      %s166 = sphi 0, %s166
      %s168 = sphi 0, %s166
      %s169 = sphi 0, %s168
      %s183 = sphi 0, %s169
      %s187 = sphi 0, %s187
      %s189 = sphi 0, %s187
      %s190 = sphi 0, %s189
      %s204 = sphi 0, %s190
      %s208 = sphi 0, %s208
      %s210 = sphi 0, %s208
      %s211 = sphi 0, %s210
      %s225 = sphi 0, %s211
      %s229 = sphi 0, %s229
      %s231 = sphi 0, %s229
      %s232 = sphi 0, %s231
      %s246 = sphi 0, %s232
      %s250 = sphi 0, %s250
      %s252 = sphi 0, %s250
      %s253 = sphi 0, %s252
      %s267 = sphi 0, %s253
      %s271 = sphi 0, %s271
      %s273 = sphi 0, %s271
      %s274 = sphi 0, %s273
      %s288 = sphi 0, %s274
      %s292 = sphi 0, %s292
      %s294 = sphi 0, %s292
      %s295 = sphi 0, %s294
      %s309 = sphi 0, %s295
      %s313 = sphi 0, %s313
      %s315 = sphi 0, %s313
      %s316 = sphi 0, %s315
      %s330 = sphi 0, %s316
      %s334 = sphi 0, %s334
      %s336 = sphi 0, %s334
      %s337 = sphi 0, %s336
      %s351 = sphi 0, %s337
      %s355 = sphi 0, %s355
      %s357 = sphi 0, %s355
      %s358 = sphi 0, %s357
      %s372 = sphi 0, %s358
      %s376 = sphi 0, %s376
      %s378 = sphi 0, %s376
      %s379 = sphi 0, %s378
      %s393 = sphi 0, %s379
      %s397 = sphi 0, %s397
      %s399 = sphi 0, %s397
      %s400 = sphi 0, %s399
      %s414 = sphi 0, %s400
      %s420 = sphi 0, %s422
      %s423 = sphi 0, %s420
      %s424 = sphi 0, %s423
      %s440 = sphi 0, %s424
    $region4: #{vit_forward.1} parent=1 // loop_header_branch
      %30 = sbr.rel (%p28) target = $region8
    $region5: #{vit_forward.1} parent=1 // loop_body
      %s32 = ssub.s32 %s27, 1
      %s33 = ssub.s32 %s27, 2
      %s34 = sadd.s32 %s27, 1
      %s35 = ssub.s32 %s27, %s34
      %p36 = scmp.eq.s32.totalorder %s35, 0
      %s38 = sadd.s32 %s37, 1
      %s39 = scalar_select %p36, %s37, %s38
      %p42 = pneg %p36
      %p43 = scmp.eq.s32.totalorder %s27, 1
      %p44 = por %p42, %p43
      %p45 = scmp.ne.s32.totalorder %s37, %s40
      %p46 = scmp.eq.s32.totalorder %s27, 0
      %p47 = por %p45, %p46
      %p48 = scmp.ne.s32.totalorder %s37, %s40
      %p49 = scmp.eq.s32.totalorder %s32, 1
      %p50 = por %p48, %p49
      %p51 = scmp.ne.s32.totalorder %s40, %s41
      %p52 = scmp.eq.s32.totalorder %s32, 0
      %p53 = por %p51, %p52
      %p54 = scmp.ne.s32.totalorder %s40, %s41
      %p55 = scmp.eq.s32.totalorder %s33, 1
      %p56 = por %p54, %p55
      %p58 = scmp.ne.s32.totalorder %s41, %s57
      %p59 = scmp.eq.s32.totalorder %s33, 0
      %p60 = por %p58, %p59
      %s62 = sadd.s32 %s61, 1
      %p65 = scmp.eq.s32.totalorder %s27, 1
      %p66 = scmp.ne.s32.totalorder %s61, %s63
      %p67 = scmp.eq.s32.totalorder %s27, 0
      %p68 = por %p66, %p67
      %p69 = scmp.ne.s32.totalorder %s61, %s63
      %p70 = scmp.eq.s32.totalorder %s32, 1
      %p71 = por %p69, %p70
      %p72 = scmp.ne.s32.totalorder %s63, %s64
      %p73 = scmp.eq.s32.totalorder %s32, 0
      %p74 = por %p72, %p73
      %p75 = scmp.ne.s32.totalorder %s63, %s64
      %p76 = scmp.eq.s32.totalorder %s33, 1
      %p77 = por %p75, %p76
      %p79 = scmp.ne.s32.totalorder %s64, %s78
      %p80 = scmp.eq.s32.totalorder %s33, 0
      %p81 = por %p79, %p80
      %s83 = sadd.s32 %s82, 1
      %p86 = scmp.eq.s32.totalorder %s27, 1
      %p87 = scmp.ne.s32.totalorder %s82, %s84
      %p88 = scmp.eq.s32.totalorder %s27, 0
      %p89 = por %p87, %p88
      %p90 = scmp.ne.s32.totalorder %s82, %s84
      %p91 = scmp.eq.s32.totalorder %s32, 1
      %p92 = por %p90, %p91
      %p93 = scmp.ne.s32.totalorder %s84, %s85
      %p94 = scmp.eq.s32.totalorder %s32, 0
      %p95 = por %p93, %p94
      %p96 = scmp.ne.s32.totalorder %s84, %s85
      %p97 = scmp.eq.s32.totalorder %s33, 1
      %p98 = por %p96, %p97
      %p100 = scmp.ne.s32.totalorder %s85, %s99
      %p101 = scmp.eq.s32.totalorder %s33, 0
      %p102 = por %p100, %p101
      %s104 = sadd.s32 %s103, 1
      %p107 = scmp.eq.s32.totalorder %s27, 1
      %p108 = scmp.ne.s32.totalorder %s103, %s105
      %p109 = scmp.eq.s32.totalorder %s27, 0
      %p110 = por %p108, %p109
      %p111 = scmp.ne.s32.totalorder %s103, %s105
      %p112 = scmp.eq.s32.totalorder %s32, 1
      %p113 = por %p111, %p112
      %p114 = scmp.ne.s32.totalorder %s105, %s106
      %p115 = scmp.eq.s32.totalorder %s32, 0
      %p116 = por %p114, %p115
      %p117 = scmp.ne.s32.totalorder %s105, %s106
      %p118 = scmp.eq.s32.totalorder %s33, 1
      %p119 = por %p117, %p118
      %p121 = scmp.ne.s32.totalorder %s106, %s120
      %p122 = scmp.eq.s32.totalorder %s33, 0
      %p123 = por %p121, %p122
      %s125 = sadd.s32 %s124, 1
      %p128 = scmp.eq.s32.totalorder %s27, 1
      %p129 = scmp.ne.s32.totalorder %s124, %s126
      %p130 = scmp.eq.s32.totalorder %s27, 0
      %p131 = por %p129, %p130
      %p132 = scmp.ne.s32.totalorder %s124, %s126
      %p133 = scmp.eq.s32.totalorder %s32, 1
      %p134 = por %p132, %p133
      %p135 = scmp.ne.s32.totalorder %s126, %s127
      %p136 = scmp.eq.s32.totalorder %s32, 0
      %p137 = por %p135, %p136
      %p138 = scmp.ne.s32.totalorder %s126, %s127
      %p139 = scmp.eq.s32.totalorder %s33, 1
      %p140 = por %p138, %p139
      %p142 = scmp.ne.s32.totalorder %s127, %s141
      %p143 = scmp.eq.s32.totalorder %s33, 0
      %p144 = por %p142, %p143
      %s146 = sadd.s32 %s145, 1
      %p149 = scmp.eq.s32.totalorder %s27, 1
      %p150 = scmp.ne.s32.totalorder %s145, %s147
      %p151 = scmp.eq.s32.totalorder %s27, 0
      %p152 = por %p150, %p151
      %p153 = scmp.ne.s32.totalorder %s145, %s147
      %p154 = scmp.eq.s32.totalorder %s32, 1
      %p155 = por %p153, %p154
      %p156 = scmp.ne.s32.totalorder %s147, %s148
      %p157 = scmp.eq.s32.totalorder %s32, 0
      %p158 = por %p156, %p157
      %p159 = scmp.ne.s32.totalorder %s147, %s148
      %p160 = scmp.eq.s32.totalorder %s33, 1
      %p161 = por %p159, %p160
      %p163 = scmp.ne.s32.totalorder %s148, %s162
      %p164 = scmp.eq.s32.totalorder %s33, 0
      %p165 = por %p163, %p164
      %s167 = sadd.s32 %s166, 1
      %p170 = scmp.eq.s32.totalorder %s27, 1
      %p171 = scmp.ne.s32.totalorder %s166, %s168
      %p172 = scmp.eq.s32.totalorder %s27, 0
      %p173 = por %p171, %p172
      %p174 = scmp.ne.s32.totalorder %s166, %s168
      %p175 = scmp.eq.s32.totalorder %s32, 1
      %p176 = por %p174, %p175
      %p177 = scmp.ne.s32.totalorder %s168, %s169
      %p178 = scmp.eq.s32.totalorder %s32, 0
      %p179 = por %p177, %p178
      %p180 = scmp.ne.s32.totalorder %s168, %s169
      %p181 = scmp.eq.s32.totalorder %s33, 1
      %p182 = por %p180, %p181
      %p184 = scmp.ne.s32.totalorder %s169, %s183
      %p185 = scmp.eq.s32.totalorder %s33, 0
      %p186 = por %p184, %p185
      %s188 = sadd.s32 %s187, 1
      %p191 = scmp.eq.s32.totalorder %s27, 1
      %p192 = scmp.ne.s32.totalorder %s187, %s189
      %p193 = scmp.eq.s32.totalorder %s27, 0
      %p194 = por %p192, %p193
      %p195 = scmp.ne.s32.totalorder %s187, %s189
      %p196 = scmp.eq.s32.totalorder %s32, 1
      %p197 = por %p195, %p196
      %p198 = scmp.ne.s32.totalorder %s189, %s190
      %p199 = scmp.eq.s32.totalorder %s32, 0
      %p200 = por %p198, %p199
      %p201 = scmp.ne.s32.totalorder %s189, %s190
      %p202 = scmp.eq.s32.totalorder %s33, 1
      %p203 = por %p201, %p202
      %p205 = scmp.ne.s32.totalorder %s190, %s204
      %p206 = scmp.eq.s32.totalorder %s33, 0
      %p207 = por %p205, %p206
      %s209 = sadd.s32 %s208, 1
      %p212 = scmp.eq.s32.totalorder %s27, 1
      %p213 = scmp.ne.s32.totalorder %s208, %s210
      %p214 = scmp.eq.s32.totalorder %s27, 0
      %p215 = por %p213, %p214
      %p216 = scmp.ne.s32.totalorder %s208, %s210
      %p217 = scmp.eq.s32.totalorder %s32, 1
      %p218 = por %p216, %p217
      %p219 = scmp.ne.s32.totalorder %s210, %s211
      %p220 = scmp.eq.s32.totalorder %s32, 0
      %p221 = por %p219, %p220
      %p222 = scmp.ne.s32.totalorder %s210, %s211
      %p223 = scmp.eq.s32.totalorder %s33, 1
      %p224 = por %p222, %p223
      %p226 = scmp.ne.s32.totalorder %s211, %s225
      %p227 = scmp.eq.s32.totalorder %s33, 0
      %p228 = por %p226, %p227
      %s230 = sadd.s32 %s229, 1
      %p233 = scmp.eq.s32.totalorder %s27, 1
      %p234 = scmp.ne.s32.totalorder %s229, %s231
      %p235 = scmp.eq.s32.totalorder %s27, 0
      %p236 = por %p234, %p235
      %p237 = scmp.ne.s32.totalorder %s229, %s231
      %p238 = scmp.eq.s32.totalorder %s32, 1
      %p239 = por %p237, %p238
      %p240 = scmp.ne.s32.totalorder %s231, %s232
      %p241 = scmp.eq.s32.totalorder %s32, 0
      %p242 = por %p240, %p241
      %p243 = scmp.ne.s32.totalorder %s231, %s232
      %p244 = scmp.eq.s32.totalorder %s33, 1
      %p245 = por %p243, %p244
      %p247 = scmp.ne.s32.totalorder %s232, %s246
      %p248 = scmp.eq.s32.totalorder %s33, 0
      %p249 = por %p247, %p248
      %s251 = sadd.s32 %s250, 1
      %p254 = scmp.eq.s32.totalorder %s27, 1
      %p255 = scmp.ne.s32.totalorder %s250, %s252
      %p256 = scmp.eq.s32.totalorder %s27, 0
      %p257 = por %p255, %p256
      %p258 = scmp.ne.s32.totalorder %s250, %s252
      %p259 = scmp.eq.s32.totalorder %s32, 1
      %p260 = por %p258, %p259
      %p261 = scmp.ne.s32.totalorder %s252, %s253
      %p262 = scmp.eq.s32.totalorder %s32, 0
      %p263 = por %p261, %p262
      %p264 = scmp.ne.s32.totalorder %s252, %s253
      %p265 = scmp.eq.s32.totalorder %s33, 1
      %p266 = por %p264, %p265
      %p268 = scmp.ne.s32.totalorder %s253, %s267
      %p269 = scmp.eq.s32.totalorder %s33, 0
      %p270 = por %p268, %p269
      %s272 = sadd.s32 %s271, 1
      %p275 = scmp.eq.s32.totalorder %s27, 1
      %p276 = scmp.ne.s32.totalorder %s271, %s273
      %p277 = scmp.eq.s32.totalorder %s27, 0
      %p278 = por %p276, %p277
      %p279 = scmp.ne.s32.totalorder %s271, %s273
      %p280 = scmp.eq.s32.totalorder %s32, 1
      %p281 = por %p279, %p280
      %p282 = scmp.ne.s32.totalorder %s273, %s274
      %p283 = scmp.eq.s32.totalorder %s32, 0
      %p284 = por %p282, %p283
      %p285 = scmp.ne.s32.totalorder %s273, %s274
      %p286 = scmp.eq.s32.totalorder %s33, 1
      %p287 = por %p285, %p286
      %p289 = scmp.ne.s32.totalorder %s274, %s288
      %p290 = scmp.eq.s32.totalorder %s33, 0
      %p291 = por %p289, %p290
      %s293 = sadd.s32 %s292, 1
      %p296 = scmp.eq.s32.totalorder %s27, 1
      %p297 = scmp.ne.s32.totalorder %s292, %s294
      %p298 = scmp.eq.s32.totalorder %s27, 0
      %p299 = por %p297, %p298
      %p300 = scmp.ne.s32.totalorder %s292, %s294
      %p301 = scmp.eq.s32.totalorder %s32, 1
      %p302 = por %p300, %p301
      %p303 = scmp.ne.s32.totalorder %s294, %s295
      %p304 = scmp.eq.s32.totalorder %s32, 0
      %p305 = por %p303, %p304
      %p306 = scmp.ne.s32.totalorder %s294, %s295
      %p307 = scmp.eq.s32.totalorder %s33, 1
      %p308 = por %p306, %p307
      %p310 = scmp.ne.s32.totalorder %s295, %s309
      %p311 = scmp.eq.s32.totalorder %s33, 0
      %p312 = por %p310, %p311
      %s314 = sadd.s32 %s313, 1
      %p317 = scmp.eq.s32.totalorder %s27, 1
      %p318 = scmp.ne.s32.totalorder %s313, %s315
      %p319 = scmp.eq.s32.totalorder %s27, 0
      %p320 = por %p318, %p319
      %p321 = scmp.ne.s32.totalorder %s313, %s315
      %p322 = scmp.eq.s32.totalorder %s32, 1
      %p323 = por %p321, %p322
      %p324 = scmp.ne.s32.totalorder %s315, %s316
      %p325 = scmp.eq.s32.totalorder %s32, 0
      %p326 = por %p324, %p325
      %p327 = scmp.ne.s32.totalorder %s315, %s316
      %p328 = scmp.eq.s32.totalorder %s33, 1
      %p329 = por %p327, %p328
      %p331 = scmp.ne.s32.totalorder %s316, %s330
      %p332 = scmp.eq.s32.totalorder %s33, 0
      %p333 = por %p331, %p332
      %s335 = sadd.s32 %s334, 1
      %p338 = scmp.eq.s32.totalorder %s27, 1
      %p339 = scmp.ne.s32.totalorder %s334, %s336
      %p340 = scmp.eq.s32.totalorder %s27, 0
      %p341 = por %p339, %p340
      %p342 = scmp.ne.s32.totalorder %s334, %s336
      %p343 = scmp.eq.s32.totalorder %s32, 1
      %p344 = por %p342, %p343
      %p345 = scmp.ne.s32.totalorder %s336, %s337
      %p346 = scmp.eq.s32.totalorder %s32, 0
      %p347 = por %p345, %p346
      %p348 = scmp.ne.s32.totalorder %s336, %s337
      %p349 = scmp.eq.s32.totalorder %s33, 1
      %p350 = por %p348, %p349
      %p352 = scmp.ne.s32.totalorder %s337, %s351
      %p353 = scmp.eq.s32.totalorder %s33, 0
      %p354 = por %p352, %p353
      %s356 = sadd.s32 %s355, 1
      %p359 = scmp.eq.s32.totalorder %s27, 1
      %p360 = scmp.ne.s32.totalorder %s355, %s357
      %p361 = scmp.eq.s32.totalorder %s27, 0
      %p362 = por %p360, %p361
      %p363 = scmp.ne.s32.totalorder %s355, %s357
      %p364 = scmp.eq.s32.totalorder %s32, 1
      %p365 = por %p363, %p364
      %p366 = scmp.ne.s32.totalorder %s357, %s358
      %p367 = scmp.eq.s32.totalorder %s32, 0
      %p368 = por %p366, %p367
      %p369 = scmp.ne.s32.totalorder %s357, %s358
      %p370 = scmp.eq.s32.totalorder %s33, 1
      %p371 = por %p369, %p370
      %p373 = scmp.ne.s32.totalorder %s358, %s372
      %p374 = scmp.eq.s32.totalorder %s33, 0
      %p375 = por %p373, %p374
      %s377 = sadd.s32 %s376, 1
      %p380 = scmp.eq.s32.totalorder %s27, 1
      %p381 = scmp.ne.s32.totalorder %s376, %s378
      %p382 = scmp.eq.s32.totalorder %s27, 0
      %p383 = por %p381, %p382
      %p384 = scmp.ne.s32.totalorder %s376, %s378
      %p385 = scmp.eq.s32.totalorder %s32, 1
      %p386 = por %p384, %p385
      %p387 = scmp.ne.s32.totalorder %s378, %s379
      %p388 = scmp.eq.s32.totalorder %s32, 0
      %p389 = por %p387, %p388
      %p390 = scmp.ne.s32.totalorder %s378, %s379
      %p391 = scmp.eq.s32.totalorder %s33, 1
      %p392 = por %p390, %p391
      %p394 = scmp.ne.s32.totalorder %s379, %s393
      %p395 = scmp.eq.s32.totalorder %s33, 0
      %p396 = por %p394, %p395
      %s398 = sadd.s32 %s397, 1
      %p401 = scmp.eq.s32.totalorder %s27, 1
      %p402 = scmp.ne.s32.totalorder %s397, %s399
      %p403 = scmp.eq.s32.totalorder %s27, 0
      %p404 = por %p402, %p403
      %p405 = scmp.ne.s32.totalorder %s397, %s399
      %p406 = scmp.eq.s32.totalorder %s32, 1
      %p407 = por %p405, %p406
      %p408 = scmp.ne.s32.totalorder %s399, %s400
      %p409 = scmp.eq.s32.totalorder %s32, 0
      %p410 = por %p408, %p409
      %p411 = scmp.ne.s32.totalorder %s399, %s400
      %p412 = scmp.eq.s32.totalorder %s33, 1
      %p413 = por %p411, %p412
      %p415 = scmp.ne.s32.totalorder %s400, %s414
      %p416 = scmp.eq.s32.totalorder %s33, 0
      %p417 = por %p415, %p416
      %s418 = ssub.s32 %s27, %s34
      %p419 = scmp.eq.s32.totalorder %s418, 0
      %s421 = sadd.s32 %s420, 1
      %s422 = scalar_select %p419, %s420, %s421
      %p425 = pneg %p419
      %p426 = scmp.eq.s32.totalorder %s27, 1
      %p427 = por %p425, %p426
      %p428 = scmp.ne.s32.totalorder %s420, %s423
      %p429 = scmp.eq.s32.totalorder %s27, 0
      %p430 = por %p428, %p429
      %p431 = scmp.ne.s32.totalorder %s420, %s423
      %p432 = scmp.eq.s32.totalorder %s32, 1
      %p433 = por %p431, %p432
      %p434 = scmp.ne.s32.totalorder %s423, %s424
      %p435 = scmp.eq.s32.totalorder %s32, 0
      %p436 = por %p434, %p435
      %p437 = scmp.ne.s32.totalorder %s423, %s424
      %p438 = scmp.eq.s32.totalorder %s33, 1
      %p439 = por %p437, %p438
      %p441 = scmp.ne.s32.totalorder %s424, %s440
      %p442 = scmp.eq.s32.totalorder %s33, 0
      %p443 = por %p441, %p442
      %p444 = scmp.le.s32.totalorder 1, %s27
      %p445 = scmp.lt.s32.totalorder %s27, 3
      %p446 = pnand %p444, %p445
      %p447 = pneg %p446
      // Predicated region
      $region9: #{vit_forward.1} parent=5 // pred_check
        _
      $region10: #{vit_forward.1} parent=5 // pred_check_branch
        %449 = sbr.rel (%p446) target = $region12
      $region11: #{vit_forward.1} parent=5 // pred_region
        %s450 = ssub.s32 %s27, 1
        // Predicated region
        $region13: #{vit_forward.1} parent=11 // pred_check
          %p451 = pneg %p74
        $region14: #{vit_forward.1} parent=11 // pred_check_branch
          %453 = sbr.rel (%p451) target = $region16
        $region15: #{vit_forward.1} parent=11 // pred_region
          _
        $region16: #{vit_forward.1} parent=11 // pred_fallthru
          _
        // Predicated region
        $region17: #{vit_forward.1} parent=11 // pred_check
          %p454 = pneg %p95
        $region18: #{vit_forward.1} parent=11 // pred_check_branch
          %456 = sbr.rel (%p454) target = $region20
        $region19: #{vit_forward.1} parent=11 // pred_region
          _
        $region20: #{vit_forward.1} parent=11 // pred_fallthru
          _
        // Predicated region
        $region21: #{vit_forward.1} parent=11 // pred_check
          %p457 = pneg %p116
        $region22: #{vit_forward.1} parent=11 // pred_check_branch
          %459 = sbr.rel (%p457) target = $region24
        $region23: #{vit_forward.1} parent=11 // pred_region
          _
        $region24: #{vit_forward.1} parent=11 // pred_fallthru
          _
        // Predicated region
        $region25: #{vit_forward.1} parent=11 // pred_check
          %p460 = pneg %p137
        $region26: #{vit_forward.1} parent=11 // pred_check_branch
          %462 = sbr.rel (%p460) target = $region28
        $region27: #{vit_forward.1} parent=11 // pred_region
          _
        $region28: #{vit_forward.1} parent=11 // pred_fallthru
          _
        // Predicated region
        $region29: #{vit_forward.1} parent=11 // pred_check
          %p463 = pneg %p158
        $region30: #{vit_forward.1} parent=11 // pred_check_branch
          %465 = sbr.rel (%p463) target = $region32
        $region31: #{vit_forward.1} parent=11 // pred_region
          _
        $region32: #{vit_forward.1} parent=11 // pred_fallthru
          _
        // Predicated region
        $region33: #{vit_forward.1} parent=11 // pred_check
          %p466 = pneg %p179
        $region34: #{vit_forward.1} parent=11 // pred_check_branch
          %468 = sbr.rel (%p466) target = $region36
        $region35: #{vit_forward.1} parent=11 // pred_region
          _
        $region36: #{vit_forward.1} parent=11 // pred_fallthru
          _
        // Predicated region
        $region37: #{vit_forward.1} parent=11 // pred_check
          %p469 = pneg %p200
        $region38: #{vit_forward.1} parent=11 // pred_check_branch
          %471 = sbr.rel (%p469) target = $region40
        $region39: #{vit_forward.1} parent=11 // pred_region
          _
        $region40: #{vit_forward.1} parent=11 // pred_fallthru
          _
        // Predicated region
        $region41: #{vit_forward.1} parent=11 // pred_check
          %p472 = pneg %p221
        $region42: #{vit_forward.1} parent=11 // pred_check_branch
          %474 = sbr.rel (%p472) target = $region44
        $region43: #{vit_forward.1} parent=11 // pred_region
          _
        $region44: #{vit_forward.1} parent=11 // pred_fallthru
          _
        // Predicated region
        $region45: #{vit_forward.1} parent=11 // pred_check
          %p475 = pneg %p242
        $region46: #{vit_forward.1} parent=11 // pred_check_branch
          %477 = sbr.rel (%p475) target = $region48
        $region47: #{vit_forward.1} parent=11 // pred_region
          _
        $region48: #{vit_forward.1} parent=11 // pred_fallthru
          _
        // Predicated region
        $region49: #{vit_forward.1} parent=11 // pred_check
          %p478 = pneg %p263
        $region50: #{vit_forward.1} parent=11 // pred_check_branch
          %480 = sbr.rel (%p478) target = $region52
        $region51: #{vit_forward.1} parent=11 // pred_region
          _
        $region52: #{vit_forward.1} parent=11 // pred_fallthru
          _
        // Predicated region
        $region53: #{vit_forward.1} parent=11 // pred_check
          %p481 = pneg %p284
        $region54: #{vit_forward.1} parent=11 // pred_check_branch
          %483 = sbr.rel (%p481) target = $region56
        $region55: #{vit_forward.1} parent=11 // pred_region
          _
        $region56: #{vit_forward.1} parent=11 // pred_fallthru
          _
        // Predicated region
        $region57: #{vit_forward.1} parent=11 // pred_check
          %p484 = pneg %p305
        $region58: #{vit_forward.1} parent=11 // pred_check_branch
          %486 = sbr.rel (%p484) target = $region60
        $region59: #{vit_forward.1} parent=11 // pred_region
          _
        $region60: #{vit_forward.1} parent=11 // pred_fallthru
          _
        // Predicated region
        $region61: #{vit_forward.1} parent=11 // pred_check
          %p487 = pneg %p326
        $region62: #{vit_forward.1} parent=11 // pred_check_branch
          %489 = sbr.rel (%p487) target = $region64
        $region63: #{vit_forward.1} parent=11 // pred_region
          _
        $region64: #{vit_forward.1} parent=11 // pred_fallthru
          _
        // Predicated region
        $region65: #{vit_forward.1} parent=11 // pred_check
          %p490 = pneg %p347
        $region66: #{vit_forward.1} parent=11 // pred_check_branch
          %492 = sbr.rel (%p490) target = $region68
        $region67: #{vit_forward.1} parent=11 // pred_region
          _
        $region68: #{vit_forward.1} parent=11 // pred_fallthru
          _
        // Predicated region
        $region69: #{vit_forward.1} parent=11 // pred_check
          %p493 = pneg %p368
        $region70: #{vit_forward.1} parent=11 // pred_check_branch
          %495 = sbr.rel (%p493) target = $region72
        $region71: #{vit_forward.1} parent=11 // pred_region
          _
        $region72: #{vit_forward.1} parent=11 // pred_fallthru
          _
        // Predicated region
        $region73: #{vit_forward.1} parent=11 // pred_check
          %p496 = pneg %p389
        $region74: #{vit_forward.1} parent=11 // pred_check_branch
          %498 = sbr.rel (%p496) target = $region76
        $region75: #{vit_forward.1} parent=11 // pred_region
          _
        $region76: #{vit_forward.1} parent=11 // pred_fallthru
          _
        // Predicated region
        $region77: #{vit_forward.1} parent=11 // pred_check
          %p499 = pneg %p410
        $region78: #{vit_forward.1} parent=11 // pred_check_branch
          %501 = sbr.rel (%p499) target = $region80
        $region79: #{vit_forward.1} parent=11 // pred_region
          _
        $region80: #{vit_forward.1} parent=11 // pred_fallthru
          _
      $region12: #{vit_forward.1} parent=5 // pred_fallthru
        _
      %p502 = scmp.lt.s32.totalorder %s27, 2
      // Predicated region
      $region81: #{vit_forward.1} parent=5 // pred_check
        %p503 = pneg %p502
      $region82: #{vit_forward.1} parent=5 // pred_check_branch
        %505 = sbr.rel (%p503) target = $region84
      $region83: #{vit_forward.1} parent=5 // pred_region
        // Predicated region
        $region85: #{vit_forward.1} parent=83 // pred_check
          %p506 = pneg %p47
        $region86: #{vit_forward.1} parent=83 // pred_check_branch
          %508 = sbr.rel (%p506) target = $region88
        $region87: #{vit_forward.1} parent=83 // pred_region
          %p509 = scmp.lt.s32.totalorder %s27, 1
          %s510 = scalar_select %p509, %s27, 1
          %s511 = smul.addr %s510, 3
          %s512 = smul.addr %s511, 8
          %s513 = scalar_lea.vmem %s0, %s512
        $region88: #{vit_forward.1} parent=83 // pred_fallthru
          _
      $region84: #{vit_forward.1} parent=5 // pred_fallthru
        _
      %p514 = scmp.le.s32.totalorder 1, %s27
      %p515 = scmp.lt.s32.totalorder %s27, 3
      %p516 = pnand %p514, %p515
      %p517 = pneg %p516
      // Predicated region
      $region89: #{vit_forward.1} parent=5 // pred_check
        _
      $region90: #{vit_forward.1} parent=5 // pred_check_branch
        %519 = sbr.rel (%p516) target = $region92
      $region91: #{vit_forward.1} parent=5 // pred_region
        %s520 = ssub.s32 %s27, 1
        %p521 = scmp.lt.s32.totalorder %s32, 1
        %s522 = scalar_select %p521, %s32, 1
        %s523 = smul.addr %s522, 3
        %s524 = smul.addr %s523, 8
        %s525 = scalar_lea.vmem %s0, %s524
        %p526 = pneg %p53
        %p527 = pneg %p50
        %p528 = pneg %p74
        %p529 = pneg %p71
        %p530 = pneg %p95
        %p531 = pneg %p92
        %p532 = pneg %p116
        %p533 = pneg %p113
        %p534 = pneg %p137
        %p535 = pneg %p134
        %p536 = pneg %p158
        %p537 = pneg %p155
        %p538 = pneg %p179
        %p539 = pneg %p176
        %p540 = pneg %p200
        %p541 = pneg %p197
        %p542 = pneg %p221
        %p543 = pneg %p218
        %p544 = pneg %p242
        %p545 = pneg %p239
        %p546 = pneg %p263
        %p547 = pneg %p260
        %p548 = pneg %p284
        %p549 = pneg %p281
        %p550 = pneg %p305
        %p551 = pneg %p302
        %p552 = pneg %p326
        %p553 = pneg %p323
        %p554 = pneg %p347
        %p555 = pneg %p344
        %p556 = pneg %p368
        %p557 = pneg %p365
        %p558 = pneg %p389
        %p559 = pneg %p386
        %p560 = pneg %p410
        %p561 = pneg %p407
        %p562 = pneg %p436
        %p563 = pneg %p433
        %s564 = sand.u32 %s423, 1
        %s565 = scalar_lea.sflag [#allocation4], %s564
        %s566 = sand.u32 %s423, 1
        %s567 = scalar_lea.vmem [#allocation3], %s566
        %p568 = scmp.lt.s32.totalorder %s32, 1
        %s569 = scalar_select %p568, %s32, 1
        %s570 = smul.addr %s569, 3
        %s571 = smul.addr %s570, 8
        %s572 = scalar_lea.vmem %s0, %s571
        %v574 = vld [vmem:[%s5] sm:$0xff]
        %v575 = vld [vmem:[%s5 + $0x8] sm:$0xf]
        %v576 = vld [vmem:[%s5 + $0xc] sm:$0xff]
        %v577 = vld [vmem:[%s5 + $0x14] sm:$0xf]
        %v578 = vld [vmem:[%s5 + $0x18] sm:$0xff]
        %v579 = vld [vmem:[%s5 + $0x20] sm:$0xf]
        %v580 = vld [vmem:[%s5 + $0x24] sm:$0xff]
        %v581 = vld [vmem:[%s5 + $0x2c] sm:$0xf]
        %v582 = vld [vmem:[%s6] sm:$0xf]
        %v583 = vld [vmem:[%s6 + $0x4] sm:$0xf]
        %v584 = vld [vmem:[%s6 + $0x8] sm:$0xf]
        %v585 = vld [vmem:[%s6 + $0xc] sm:$0xf]
        %v586 = vld [vmem:[%s6 + $0x10] sm:$0xf]
        %v587 = vld [vmem:[%s6 + $0x14] sm:$0xf]
        %v588 = vld [vmem:[%s6 + $0x18] sm:$0xf]
        %v589 = vld [vmem:[%s6 + $0x1c] sm:$0xf]
        %v590 = vld [vmem:[%s6 + $0x20] sm:$0xf]
        %v591 = vld [vmem:[%s6 + $0x24] sm:$0xf]
        %v592 = vld [vmem:[%s6 + $0x28] sm:$0xf]
        %v593 = vld [vmem:[%s6 + $0x2c] sm:$0xf]
        %v594 = vld [vmem:[%s6 + $0x30] sm:$0xf]
        %v595 = vld [vmem:[%s6 + $0x34] sm:$0xf]
        %v596 = vld [vmem:[%s6 + $0x38] sm:$0xf]
        %v597 = vld [vmem:[%s6 + $0x3c] sm:$0xf]
        %v598 = vld [vmem:[%s10] sm:$0xf]
        %v599 = vld [vmem:[%s10 + $0x4] sm:$0xf]
        %v600 = vld [vmem:[%s10 + $0x8] sm:$0xf]
        %v601 = vld [vmem:[%s10 + $0xc] sm:$0xf]
        %v602 = vld [vmem:[%s12] sm:$0xf]
        %v603 = vld [vmem:[%s12 + $0x4] sm:$0xf]
        %v604 = vld [vmem:[%s12 + $0x8] sm:$0xf]
        %v605 = vld [vmem:[%s12 + $0xc] sm:$0xf]
        %v606 = vld [vmem:[%s12 + $0x10] sm:$0xf]
        %v607 = vld [vmem:[%s12 + $0x14] sm:$0xf]
        %v608 = vld [vmem:[%s12 + $0x18] sm:$0xf]
        %v609 = vld [vmem:[%s12 + $0x1c] sm:$0xf]
        %v610 = vld [vmem:[%s3] sm:$0x1]
        %v612 = vlaneseq
        %v613 = vshrl.u32 %v612, 7
        %v614 = vsub.s32 0, %v613
        %v615 = vrot.slane %v610, %v614
        %v617 = vld [vmem:[%s4] sm:$0x1]
        %v619 = vlaneseq
        %v620 = vshrl.u32 %v619, 7
        %v621 = vsub.s32 0, %v620
        %v622 = vrot.slane %v617, %v621
        %v624 = vld [vmem:[%s8] sm:$0x1]
        %v626 = vlaneseq
        %v627 = vshrl.u32 %v626, 7
        %v628 = vsub.s32 0, %v627
        %v629 = vrot.slane %v624, %v628
        %v631 = vld [vmem:[%s9] sm:$0x1]
        %v633 = vlaneseq
        %v634 = vshrl.u32 %v633, 7
        %v635 = vsub.s32 0, %v634
        %v636 = vrot.slane %v631, %v635
        %v638 = vld [vmem:[%s7] sm:$0x1]
        %v640 = vlaneseq
        %v641 = vshrl.u32 %v640, 7
        %v642 = vsub.s32 0, %v641
        %v643 = vrot.slane %v638, %v642
        %v645 = vld [vmem:[%s11] sm:$0x1]
        %v647 = vlaneseq
        %v648 = vshrl.u32 %v647, 7
        %v649 = vsub.s32 0, %v648
        %v650 = vrot.slane %v645, %v649
        %v652 = vld [vmem:[%s13] sm:$0x1]
        %v654 = vlaneseq
        %v655 = vshrl.u32 %v654, 7
        %v656 = vsub.s32 0, %v655
        %v657 = vrot.slane %v652, %v656
        %v659 = vlaneseq
        %v660 = vand.u32 %v659, 127
        %vm661 = vcmp.lt.s32.totalorder %v660, 17
        %v662 = vsel %vm661, 0.0, -1e+30
        %v663 = vld [vmem:[%s572] sm:$0xff]
        %v664 = vld [vmem:[%s572 + $0x8] sm:$0xff]
        %v665 = vld [vmem:[%s572 + $0x10] sm:$0xff]
        %v666 = vpack.c.bf16 %v664, %v663
        %v667 = vpack.c.bf16 %v665, %v665
        %v668 = vld [vmem:[%s1] sm:$0xf]
        %v669 = vld [vmem:[%s1 + $0x4] sm:$0xf]
        %v670 = vld [vmem:[%s1 + $0x8] sm:$0xf]
        %v671 = vld [vmem:[%s1 + $0xc] sm:$0xf]
        %v672 = vld [vmem:[%s1 + $0x10] sm:$0xf]
        %v673 = vld [vmem:[%s1 + $0x14] sm:$0xf]
        %v674 = vld [vmem:[%s1 + $0x18] sm:$0xf]
        %v675 = vld [vmem:[%s1 + $0x1c] sm:$0xf]
        %v676 = vld [vmem:[%s2] sm:$0xff]
        %v677 = vld [vmem:[%s2 + $0x8] sm:$0xff]
        %v678 = vld [vmem:[%s2 + $0x10] sm:$0xff]
        %v687 = vunpack.c.l.b16 %v668
        %v688 = vunpack.c.l.b16 %v669
        %v689 = vunpack.c.l.b16 %v670
        %v690 = vunpack.c.l.b16 %v671
        %v691 = vunpack.c.l.b16 %v672
        %v692 = vunpack.c.l.b16 %v673
        %v693 = vunpack.c.l.b16 %v674
        %v694 = vunpack.c.l.b16 %v675
        %v695 = vpack.c.b16 %v688, %v687
        %v696 = vpack.c.b16 %v690, %v689
        %v697 = vpack.c.b16 %v692, %v691
        %v698 = vpack.c.b16 %v694, %v693
        %vm703 = vcmask 523264
        %v705 = vsel %vm703, %v666, 0
        %v708 = vsel %vm703, %v667, 0
        %710 = vmatprep.subr.bf16.mxu0 0
        %711 = vmatpush1.bf16.msra.mxu0 %v695
        %712 = vmatprep.subr.bf16.mxu0 0
        %713 = vmatpush1.bf16.msra.mxu0 %v696
        %714 = vmatprep.subr.bf16.mxu0 0
        %715 = vmatpush1.bf16.msra.mxu0 %v697
        %716 = vmatprep.subr.bf16.mxu0 0
        %717 = vmatpush1.bf16.msra.mxu0 %v698
        %718 = vmatprep.subr.bf16.mxu0 0
        %719 = vmatpush1.bf16.msra.mxu0 0
        %720 = vmatprep.subr.bf16.mxu0 0
        %721 = vmatpush1.bf16.msra.mxu0 0
        %722 = vmatprep.subr.bf16.mxu0 0
        %723 = vmatpush1.bf16.msra.mxu0 0
        %724 = vmatprep.subr.bf16.mxu0 0
        %725 = vmatpush1.bf16.msra.mxu0 0
        %726 = vmatprep.subr.bf16.mxu0 0
        %727 = vmatpush1.bf16.msra.mxu0 0
        %728 = vmatprep.subr.bf16.mxu0 0
        %729 = vmatpush1.bf16.msra.mxu0 0
        %730 = vmatprep.subr.bf16.mxu0 0
        %731 = vmatpush1.bf16.msra.mxu0 0
        %732 = vmatprep.subr.bf16.mxu0 0
        %733 = vmatpush1.bf16.msra.mxu0 0
        %734 = vmatprep.subr.bf16.mxu0 0
        %735 = vmatpush1.bf16.msra.mxu0 0
        %736 = vmatprep.subr.bf16.mxu0 0
        %737 = vmatpush1.bf16.msra.mxu0 0
        %738 = vmatprep.subr.bf16.mxu0 0
        %739 = vmatpush1.bf16.msra.mxu0 0
        %740 = vmatprep.subr.bf16.mxu0 0
        %741 = vmatpush1.bf16.msra.mxu0 0
        %742 = vmatprep.mubr.bf16.mxu0 0
        %743 = vmatmul.mubr.bf16.gmra.mrb[0].mxu0 %v705
        %v744 = vpop.f32.mrb[0].mxu0
        %v745 = vadd.f32 %v676, %v744
        %v746 = vpop.f32.mrb[0].mxu0
        %v747 = vpop.f32.mrb[0].mxu0
        %v748 = vadd.f32 %v677, %v747
        %v749 = vpop.f32.mrb[0].mxu0
        %750 = vmatprep.mubr.bf16.mxu0 0
        %751 = vmatmul.mubr.bf16.gmra.mrb[0].mxu0 %v708
        %v752 = vpop.f32.mrb[0].mxu0
        %v753 = vadd.f32 %v678, %v752
        %v754 = vpop.f32.mrb[0].mxu0
        %v755 = vpop.f32.mrb[0].mxu0
        %v756 = vpop.f32.mrb[0].mxu0
        %757 = vdwg.mxu0
        %vm758 = vcmask 261120
        %759 = vst.msk [vmem:[#allocation2] sm:$0xff] %vm758, %v745
        %760 = vst.msk [vmem:[#allocation2 + $0x8] sm:$0xff] %vm758, %v748
        %761 = vst.msk [vmem:[#allocation2 + $0x10] sm:$0xff] %vm758, %v753
        %v762 = vld [vmem:[#allocation2] sm:$0xff]
        %v763 = vld [vmem:[#allocation2 + $0x8] sm:$0xff]
        %v764 = vld [vmem:[#allocation2 + $0x10] sm:$0xff]
        %v765 = vsel %vm758, %v762, 0.0
        %766 = vadd.xlane.f32.xlu0 %v765
        %v767 = vpop.xlane.xlu0 %766
        %v768 = vsel %vm758, %v763, 0.0
        %769 = vadd.xlane.f32.xlu0 %v768
        %v770 = vpop.xlane.xlu0 %769
        %v771 = vsel %vm758, %v764, 0.0
        %772 = vadd.xlane.f32.xlu0 %v771
        %v773 = vpop.xlane.xlu0 %772
        %v774 = vrcp.pop 32.0
        %v775 = vmul.f32 %v767, %v774
        %v776 = vmul.f32 %v770, %v774
        %v777 = vmul.f32 %v773, %v774
        %v778 = vsub.f32 %v762, %v775
        %v779 = vsub.f32 %v763, %v776
        %v780 = vsub.f32 %v764, %v777
        %v781 = vmul.f32 %v778, %v778
        %v782 = vmul.f32 %v779, %v779
        %v783 = vmul.f32 %v780, %v780
        %v784 = vsel %vm758, %v781, 0.0
        %785 = vadd.xlane.f32.xlu0 %v784
        %v786 = vpop.xlane.xlu0 %785
        %v787 = vsel %vm758, %v782, 0.0
        %788 = vadd.xlane.f32.xlu0 %v787
        %v789 = vpop.xlane.xlu0 %788
        %v790 = vsel %vm758, %v783, 0.0
        %791 = vadd.xlane.f32.xlu0 %v790
        %v792 = vpop.xlane.xlu0 %791
        %v793 = vmul.f32 %v786, %v774
        %v794 = vmul.f32 %v789, %v774
        %v795 = vmul.f32 %v792, %v774
        %v796 = vadd.f32 %v793, 1e-05
        %v797 = vadd.f32 %v794, 1e-05
        %v798 = vadd.f32 %v795, 1e-05
        %v799 = vrsqrt.pop %v796
        %v800 = vrsqrt.pop %v797
        %v801 = vrsqrt.pop %v798
        %v802 = vmul.f32 %v778, %v799
        %v803 = vmul.f32 %v779, %v800
        %v804 = vmul.f32 %v780, %v801
        %v805 = vmul.f32 %v802, %v615
        %v806 = vmul.f32 %v803, %v615
        %v807 = vmul.f32 %v804, %v615
        %v808 = vadd.f32 %v805, %v622
        %v809 = vadd.f32 %v806, %v622
        %v810 = vadd.f32 %v807, %v622
        %v811 = vpack.c.bf16 %v809, %v808
        %v812 = vpack.c.bf16 %v810, %v810
        %v821 = vunpack.c.l.b16 %v574
        %v822 = vunpack.c.h.b16 %v574
        %v823 = vunpack.c.l.b16 %v575
        %v824 = vunpack.c.l.b16 %v576
        %v825 = vunpack.c.h.b16 %v576
        %v826 = vunpack.c.l.b16 %v577
        %v827 = vunpack.c.l.b16 %v578
        %v828 = vunpack.c.h.b16 %v578
        %v829 = vunpack.c.l.b16 %v579
        %v830 = vunpack.c.l.b16 %v580
        %v831 = vunpack.c.h.b16 %v580
        %v832 = vunpack.c.l.b16 %v581
        %v833 = vpack.c.b16 %v824, %v821
        %v834 = vpack.c.b16 %v825, %v822
        %v835 = vpack.c.b16 %v826, %v823
        %v836 = vpack.c.b16 %v830, %v827
        %v837 = vpack.c.b16 %v831, %v828
        %v838 = vpack.c.b16 %v832, %v829
        %v846 = vsel %vm758, %v811, 0
        %v849 = vsel %vm758, %v812, 0
        %851 = vmatprep.subr.bf16.mxu0 %v834
        %852 = vmatpush1.bf16.msra.mxu0 %v833
        %853 = vmatprep.subr.bf16.mxu0 %v837
        %854 = vmatpush1.bf16.msra.mxu0 %v836
        %855 = vmatprep.subr.bf16.mxu0 0
        %856 = vmatpush1.bf16.msra.mxu0 0
        %857 = vmatprep.subr.bf16.mxu0 0
        %858 = vmatpush1.bf16.msra.mxu0 0
        %859 = vmatprep.subr.bf16.mxu0 0
        %860 = vmatpush1.bf16.msra.mxu0 0
        %861 = vmatprep.subr.bf16.mxu0 0
        %862 = vmatpush1.bf16.msra.mxu0 0
        %863 = vmatprep.subr.bf16.mxu0 0
        %864 = vmatpush1.bf16.msra.mxu0 0
        %865 = vmatprep.subr.bf16.mxu0 0
        %866 = vmatpush1.bf16.msra.mxu0 0
        %867 = vmatprep.subr.bf16.mxu0 0
        %868 = vmatpush1.bf16.msra.mxu0 0
        %869 = vmatprep.subr.bf16.mxu0 0
        %870 = vmatpush1.bf16.msra.mxu0 0
        %871 = vmatprep.subr.bf16.mxu0 0
        %872 = vmatpush1.bf16.msra.mxu0 0
        %873 = vmatprep.subr.bf16.mxu0 0
        %874 = vmatpush1.bf16.msra.mxu0 0
        %875 = vmatprep.subr.bf16.mxu0 0
        %876 = vmatpush1.bf16.msra.mxu0 0
        %877 = vmatprep.subr.bf16.mxu0 0
        %878 = vmatpush1.bf16.msra.mxu0 0
        %879 = vmatprep.subr.bf16.mxu0 0
        %880 = vmatpush1.bf16.msra.mxu0 0
        %881 = vmatprep.subr.bf16.mxu0 0
        %882 = vmatpush1.bf16.msra.mxu0 0
        %883 = vmatprep.mubr.bf16.mxu0 0
        %884 = vmatmul.mubr.bf16.gmra.mrb[0].mxu0 %v846
        %v885 = vpop.f32.mrb[0].mxu0
        %v886 = vadd.f32 0.0, %v885
        %v887 = vpop.f32.mrb[0].mxu0
        %v888 = vadd.f32 0.0, %v887
        %v889 = vpop.f32.mrb[0].mxu0
        %v890 = vadd.f32 0.0, %v889
        %v891 = vpop.f32.mrb[0].mxu0
        %v892 = vadd.f32 0.0, %v891
        %893 = vmatprep.mubr.bf16.mxu0 0
        %894 = vmatmul.mubr.bf16.gmra.mrb[0].mxu0 %v849
        %v895 = vpop.f32.mrb[0].mxu0
        %v896 = vadd.f32 0.0, %v895
        %v897 = vpop.f32.mrb[0].mxu0
        %v898 = vadd.f32 0.0, %v897
        %v899 = vpop.f32.mrb[0].mxu0
        %v900 = vpop.f32.mrb[0].mxu0
        %901 = vdwg.mxu0
        %902 = vmatprep.subr.bf16.mxu0 0
        %903 = vmatpush1.bf16.msra.mxu0 %v835
        %904 = vmatprep.subr.bf16.mxu0 0
        %905 = vmatpush1.bf16.msra.mxu0 %v838
        %906 = vmatprep.subr.bf16.mxu0 0
        %907 = vmatpush1.bf16.msra.mxu0 0
        %908 = vmatprep.subr.bf16.mxu0 0
        %909 = vmatpush1.bf16.msra.mxu0 0
        %910 = vmatprep.subr.bf16.mxu0 0
        %911 = vmatpush1.bf16.msra.mxu0 0
        %912 = vmatprep.subr.bf16.mxu0 0
        %913 = vmatpush1.bf16.msra.mxu0 0
        %914 = vmatprep.subr.bf16.mxu0 0
        %915 = vmatpush1.bf16.msra.mxu0 0
        %916 = vmatprep.subr.bf16.mxu0 0
        %917 = vmatpush1.bf16.msra.mxu0 0
        %918 = vmatprep.subr.bf16.mxu0 0
        %919 = vmatpush1.bf16.msra.mxu0 0
        %920 = vmatprep.subr.bf16.mxu0 0
        %921 = vmatpush1.bf16.msra.mxu0 0
        %922 = vmatprep.subr.bf16.mxu0 0
        %923 = vmatpush1.bf16.msra.mxu0 0
        %924 = vmatprep.subr.bf16.mxu0 0
        %925 = vmatpush1.bf16.msra.mxu0 0
        %926 = vmatprep.subr.bf16.mxu0 0
        %927 = vmatpush1.bf16.msra.mxu0 0
        %928 = vmatprep.subr.bf16.mxu0 0
        %929 = vmatpush1.bf16.msra.mxu0 0
        %930 = vmatprep.subr.bf16.mxu0 0
        %931 = vmatpush1.bf16.msra.mxu0 0
        %932 = vmatprep.subr.bf16.mxu0 0
        %933 = vmatpush1.bf16.msra.mxu0 0
        %934 = vmatprep.mubr.bf16.mxu0 0
        %935 = vmatmul.mubr.bf16.gmra.mrb[0].mxu0 %v846
        %v936 = vpop.f32.mrb[0].mxu0
        %v937 = vadd.f32 0.0, %v936
        %v938 = vpop.f32.mrb[0].mxu0
        %v939 = vpop.f32.mrb[0].mxu0
        %v940 = vadd.f32 0.0, %v939
        %v941 = vpop.f32.mrb[0].mxu0
        %942 = vmatprep.mubr.bf16.mxu0 0
        %943 = vmatmul.mubr.bf16.gmra.mrb[0].mxu0 %v849
        %v944 = vpop.f32.mrb[0].mxu0
        %v945 = vadd.f32 0.0, %v944
        %v946 = vpop.f32.mrb[0].mxu0
        %v947 = vpop.f32.mrb[0].mxu0
        %v948 = vpop.f32.mrb[0].mxu0
        %949 = vdwg.mxu0
        %v950 = vpack.c.bf16 %v890, %v886
        %v951 = vpack.c.bf16 %v892, %v888
        %v952 = vpack.c.bf16 %v940, %v937
        %v953 = vpack.c.bf16 %v896, %v896
        %v954 = vpack.c.bf16 %v898, %v898
        %v955 = vpack.c.bf16 %v945, %v945
        %956 = vmatprep.subr.bf16.mxu0 0
        %957 = vmatpush1.bf16.xpose.msra.mxu0 %v951
        %958 = vmatprep.subr.bf16.mxu0 0
        %959 = vmatpush1.bf16.xpose.msra.mxu0 %v954
        %960 = vmatprep.subr.bf16.mxu0 0
        %961 = vmatpush1.bf16.xpose.msra.mxu0 0
        %962 = vmatprep.subr.bf16.mxu0 0
        %963 = vmatpush1.bf16.xpose.msra.mxu0 0
        %964 = vmatprep.subr.bf16.mxu0 0
        %965 = vmatpush1.bf16.xpose.msra.mxu0 0
        %966 = vmatprep.subr.bf16.mxu0 0
        %967 = vmatpush1.bf16.xpose.msra.mxu0 0
        %968 = vmatprep.subr.bf16.mxu0 0
        %969 = vmatpush1.bf16.xpose.msra.mxu0 0
        %970 = vmatprep.subr.bf16.mxu0 0
        %971 = vmatpush1.bf16.xpose.msra.mxu0 0
        %972 = vmatprep.subr.bf16.mxu0 0
        %973 = vmatpush1.bf16.xpose.msra.mxu0 0
        %974 = vmatprep.subr.bf16.mxu0 0
        %975 = vmatpush1.bf16.xpose.msra.mxu0 0
        %976 = vmatprep.subr.bf16.mxu0 0
        %977 = vmatpush1.bf16.xpose.msra.mxu0 0
        %978 = vmatprep.subr.bf16.mxu0 0
        %979 = vmatpush1.bf16.xpose.msra.mxu0 0
        %980 = vmatprep.subr.bf16.mxu0 0
        %981 = vmatpush1.bf16.xpose.msra.mxu0 0
        %982 = vmatprep.subr.bf16.mxu0 0
        %983 = vmatpush1.bf16.xpose.msra.mxu0 0
        %984 = vmatprep.subr.bf16.mxu0 0
        %985 = vmatpush1.bf16.xpose.msra.mxu0 0
        %986 = vmatprep.subr.bf16.mxu0 0
        %987 = vmatpush1.bf16.xpose.msra.mxu0 0
        %988 = vmatprep.mubr.bf16.mxu0 0
        %989 = vmatmul.mubr.bf16.gmra.mrb[0].mxu0 %v950
        %v990 = vpop.f32.mrb[0].mxu0
        %v991 = vadd.f32 %v662, %v990
        %v992 = vpop.f32.mrb[0].mxu0
        %v993 = vpop.f32.mrb[0].mxu0
        %v994 = vadd.f32 %v662, %v993
        %v995 = vpop.f32.mrb[0].mxu0
        %996 = vmatprep.mubr.bf16.mxu0 0
        %997 = vmatmul.mubr.bf16.gmra.mrb[0].mxu0 %v953
        %v998 = vpop.f32.mrb[0].mxu0
        %v999 = vadd.f32 %v662, %v998
        %v1000 = vpop.f32.mrb[0].mxu0
        %v1001 = vpop.f32.mrb[0].mxu0
        %v1002 = vpop.f32.mrb[0].mxu0
        %1003 = vdwg.mxu0
        %vm1004 = vcmask 195584
        %v1005 = vsel %vm1004, %v991, -inf
        %1006 = vmax.xlane.f32.xlu0 %v1005
        %v1007 = vpop.xlane.xlu0 %1006
        %v1008 = vsel %vm1004, %v994, -inf
        %1009 = vmax.xlane.f32.xlu0 %v1008
        %v1010 = vpop.xlane.xlu0 %1009
        %v1011 = vsel %vm1004, %v999, -inf
        %1012 = vmax.xlane.f32.xlu0 %v1011
        %v1013 = vpop.xlane.xlu0 %1012
        %v1014 = vsub.f32 %v991, %v1007
        %v1015 = vsub.f32 %v994, %v1010
        %v1016 = vsub.f32 %v999, %v1013
        %v1017 = vmul.f32 %v1014, 1.442695
        %v1018 = vpow.pop %v1017
        %v1019 = vmul.f32 %v1015, 1.442695
        %v1020 = vpow.pop %v1019
        %v1021 = vmul.f32 %v1016, 1.442695
        %v1022 = vpow.pop %v1021
        %v1023 = vsel %vm1004, %v1018, 0.0
        %1024 = vadd.xlane.f32.xlu0 %v1023
        %v1025 = vpop.xlane.xlu0 %1024
        %v1026 = vsel %vm1004, %v1020, 0.0
        %1027 = vadd.xlane.f32.xlu0 %v1026
        %v1028 = vpop.xlane.xlu0 %1027
        %v1029 = vsel %vm1004, %v1022, 0.0
        %1030 = vadd.xlane.f32.xlu0 %v1029
        %v1031 = vpop.xlane.xlu0 %1030
        %v1032 = vrcp.pop %v1025
        %v1033 = vrcp.pop %v1028
        %v1034 = vrcp.pop %v1031
        %v1035 = vmul.f32 %v1018, %v1032
        %v1036 = vmul.f32 %v1020, %v1033
        %v1037 = vmul.f32 %v1022, %v1034
        %v1038 = vpack.c.bf16 %v1036, %v1035
        %v1039 = vpack.c.bf16 %v1037, %v1037
        %v1041 = vsel %vm1004, %v1038, 0
        %v1044 = vsel %vm1004, %v1039, 0
        %vm1046 = vcmask 1043456
        %v1048 = vsel %vm1046, %v955, 0
        %1050 = vmatprep.subr.bf16.mxu0 0
        %1051 = vmatpush1.bf16.msra.mxu0 %v952
        %1052 = vmatprep.subr.bf16.mxu0 0
        %1053 = vmatpush1.bf16.msra.mxu0 %v1048
        %1054 = vmatprep.subr.bf16.mxu0 0
        %1055 = vmatpush1.bf16.msra.mxu0 0
        %1056 = vmatprep.subr.bf16.mxu0 0
        %1057 = vmatpush1.bf16.msra.mxu0 0
        %1058 = vmatprep.subr.bf16.mxu0 0
        %1059 = vmatpush1.bf16.msra.mxu0 0
        %1060 = vmatprep.subr.bf16.mxu0 0
        %1061 = vmatpush1.bf16.msra.mxu0 0
        %1062 = vmatprep.subr.bf16.mxu0 0
        %1063 = vmatpush1.bf16.msra.mxu0 0
        %1064 = vmatprep.subr.bf16.mxu0 0
        %1065 = vmatpush1.bf16.msra.mxu0 0
        %1066 = vmatprep.subr.bf16.mxu0 0
        %1067 = vmatpush1.bf16.msra.mxu0 0
        %1068 = vmatprep.subr.bf16.mxu0 0
        %1069 = vmatpush1.bf16.msra.mxu0 0
        %1070 = vmatprep.subr.bf16.mxu0 0
        %1071 = vmatpush1.bf16.msra.mxu0 0
        %1072 = vmatprep.subr.bf16.mxu0 0
        %1073 = vmatpush1.bf16.msra.mxu0 0
        %1074 = vmatprep.subr.bf16.mxu0 0
        %1075 = vmatpush1.bf16.msra.mxu0 0
        %1076 = vmatprep.subr.bf16.mxu0 0
        %1077 = vmatpush1.bf16.msra.mxu0 0
        %1078 = vmatprep.subr.bf16.mxu0 0
        %1079 = vmatpush1.bf16.msra.mxu0 0
        %1080 = vmatprep.subr.bf16.mxu0 0
        %1081 = vmatpush1.bf16.msra.mxu0 0
        %1082 = vmatprep.mubr.bf16.mxu0 0
        %1083 = vmatmul.mubr.bf16.gmra.mrb[0].mxu0 %v1041
        %v1084 = vpop.f32.mrb[0].mxu0
        %v1085 = vadd.f32 0.0, %v1084
        %v1086 = vpop.f32.mrb[0].mxu0
        %v1087 = vpop.f32.mrb[0].mxu0
        %v1088 = vadd.f32 0.0, %v1087
        %v1089 = vpop.f32.mrb[0].mxu0
        %1090 = vmatprep.mubr.bf16.mxu0 0
        %1091 = vmatmul.mubr.bf16.gmra.mrb[0].mxu0 %v1044
        %v1092 = vpop.f32.mrb[0].mxu0
        %v1093 = vadd.f32 0.0, %v1092
        %v1094 = vpop.f32.mrb[0].mxu0
        %v1095 = vpop.f32.mrb[0].mxu0
        %v1096 = vpop.f32.mrb[0].mxu0
        %1097 = vdwg.mxu0
        %v1098 = vpack.c.bf16 %v1088, %v1085
        %v1099 = vpack.c.bf16 %v1093, %v1093
        %v1116 = vunpack.c.l.b16 %v582
        %v1117 = vunpack.c.l.b16 %v583
        %v1118 = vunpack.c.l.b16 %v584
        %v1119 = vunpack.c.l.b16 %v585
        %v1120 = vunpack.c.l.b16 %v586
        %v1121 = vunpack.c.l.b16 %v587
        %v1122 = vunpack.c.l.b16 %v588
        %v1123 = vunpack.c.l.b16 %v589
        %v1124 = vunpack.c.l.b16 %v590
        %v1125 = vunpack.c.l.b16 %v591
        %v1126 = vunpack.c.l.b16 %v592
        %v1127 = vunpack.c.l.b16 %v593
        %v1128 = vunpack.c.l.b16 %v594
        %v1129 = vunpack.c.l.b16 %v595
        %v1130 = vunpack.c.l.b16 %v596
        %v1131 = vunpack.c.l.b16 %v597
        %v1132 = vpack.c.b16 %v1117, %v1116
        %v1133 = vpack.c.b16 %v1119, %v1118
        %v1134 = vpack.c.b16 %v1121, %v1120
        %v1135 = vpack.c.b16 %v1123, %v1122
        %v1136 = vpack.c.b16 %v1125, %v1124
        %v1137 = vpack.c.b16 %v1127, %v1126
        %v1138 = vpack.c.b16 %v1129, %v1128
        %v1139 = vpack.c.b16 %v1131, %v1130
        %1148 = vmatprep.subr.bf16.mxu0 0
        %1149 = vmatpush1.bf16.msra.mxu0 %v1132
        %1150 = vmatprep.subr.bf16.mxu0 0
        %1151 = vmatpush1.bf16.msra.mxu0 %v1133
        %1152 = vmatprep.subr.bf16.mxu0 0
        %1153 = vmatpush1.bf16.msra.mxu0 %v1134
        %1154 = vmatprep.subr.bf16.mxu0 0
        %1155 = vmatpush1.bf16.msra.mxu0 %v1135
        %1156 = vmatprep.subr.bf16.mxu0 0
        %1157 = vmatpush1.bf16.msra.mxu0 %v1136
        %1158 = vmatprep.subr.bf16.mxu0 0
        %1159 = vmatpush1.bf16.msra.mxu0 %v1137
        %1160 = vmatprep.subr.bf16.mxu0 0
        %1161 = vmatpush1.bf16.msra.mxu0 %v1138
        %1162 = vmatprep.subr.bf16.mxu0 0
        %1163 = vmatpush1.bf16.msra.mxu0 %v1139
        %1164 = vmatprep.subr.bf16.mxu0 0
        %1165 = vmatpush1.bf16.msra.mxu0 0
        %1166 = vmatprep.subr.bf16.mxu0 0
        %1167 = vmatpush1.bf16.msra.mxu0 0
        %1168 = vmatprep.subr.bf16.mxu0 0
        %1169 = vmatpush1.bf16.msra.mxu0 0
        %1170 = vmatprep.subr.bf16.mxu0 0
        %1171 = vmatpush1.bf16.msra.mxu0 0
        %1172 = vmatprep.subr.bf16.mxu0 0
        %1173 = vmatpush1.bf16.msra.mxu0 0
        %1174 = vmatprep.subr.bf16.mxu0 0
        %1175 = vmatpush1.bf16.msra.mxu0 0
        %1176 = vmatprep.subr.bf16.mxu0 0
        %1177 = vmatpush1.bf16.msra.mxu0 0
        %1178 = vmatprep.subr.bf16.mxu0 0
        %1179 = vmatpush1.bf16.msra.mxu0 0
        %1180 = vmatprep.mubr.bf16.mxu0 0
        %1181 = vmatmul.mubr.bf16.gmra.mrb[0].mxu0 %v1098
        %v1182 = vpop.f32.mrb[0].mxu0
        %v1183 = vadd.f32 %v643, %v1182
        %v1184 = vpop.f32.mrb[0].mxu0
        %v1185 = vpop.f32.mrb[0].mxu0
        %v1186 = vadd.f32 %v643, %v1185
        %v1187 = vpop.f32.mrb[0].mxu0
        %1188 = vmatprep.mubr.bf16.mxu0 0
        %1189 = vmatmul.mubr.bf16.gmra.mrb[0].mxu0 %v1099
        %v1190 = vpop.f32.mrb[0].mxu0
        %v1191 = vadd.f32 %v643, %v1190
        %v1192 = vpop.f32.mrb[0].mxu0
        %v1193 = vpop.f32.mrb[0].mxu0
        %v1194 = vpop.f32.mrb[0].mxu0
        %1195 = vdwg.mxu0
        %v1196 = vadd.f32 %v1183, %v762
        %v1197 = vadd.f32 %v1186, %v763
        %v1198 = vadd.f32 %v1191, %v764
        %v1199 = vsel %vm758, %v1196, 0.0
        %1200 = vadd.xlane.f32.xlu0 %v1199
        %v1201 = vpop.xlane.xlu0 %1200
        %v1202 = vsel %vm758, %v1197, 0.0
        %1203 = vadd.xlane.f32.xlu0 %v1202
        %v1204 = vpop.xlane.xlu0 %1203
        %v1205 = vsel %vm758, %v1198, 0.0
        %1206 = vadd.xlane.f32.xlu0 %v1205
        %v1207 = vpop.xlane.xlu0 %1206
        %v1208 = vmul.f32 %v1201, %v774
        %v1209 = vmul.f32 %v1204, %v774
        %v1210 = vmul.f32 %v1207, %v774
        %v1211 = vsub.f32 %v1196, %v1208
        %v1212 = vsub.f32 %v1197, %v1209
        %v1213 = vsub.f32 %v1198, %v1210
        %v1214 = vmul.f32 %v1211, %v1211
        %v1215 = vmul.f32 %v1212, %v1212
        %v1216 = vmul.f32 %v1213, %v1213
        %v1217 = vsel %vm758, %v1214, 0.0
        %1218 = vadd.xlane.f32.xlu0 %v1217
        %v1219 = vpop.xlane.xlu0 %1218
        %v1220 = vsel %vm758, %v1215, 0.0
        %1221 = vadd.xlane.f32.xlu0 %v1220
        %v1222 = vpop.xlane.xlu0 %1221
        %v1223 = vsel %vm758, %v1216, 0.0
        %1224 = vadd.xlane.f32.xlu0 %v1223
        %v1225 = vpop.xlane.xlu0 %1224
        %v1226 = vmul.f32 %v1219, %v774
        %v1227 = vmul.f32 %v1222, %v774
        %v1228 = vmul.f32 %v1225, %v774
        %v1229 = vadd.f32 %v1226, 1e-05
        %v1230 = vadd.f32 %v1227, 1e-05
        %v1231 = vadd.f32 %v1228, 1e-05
        %v1232 = vrsqrt.pop %v1229
        %v1233 = vrsqrt.pop %v1230
        %v1234 = vrsqrt.pop %v1231
        %v1235 = vmul.f32 %v1211, %v1232
        %v1236 = vmul.f32 %v1212, %v1233
        %v1237 = vmul.f32 %v1213, %v1234
        %v1238 = vmul.f32 %v1235, %v629
        %v1239 = vmul.f32 %v1236, %v629
        %v1240 = vmul.f32 %v1237, %v629
        %v1241 = vadd.f32 %v1238, %v636
        %v1242 = vadd.f32 %v1239, %v636
        %v1243 = vadd.f32 %v1240, %v636
        %v1244 = vpack.c.bf16 %v1242, %v1241
        %v1245 = vpack.c.bf16 %v1243, %v1243
        %v1250 = vunpack.c.l.b16 %v598
        %v1251 = vunpack.c.l.b16 %v599
        %v1252 = vunpack.c.l.b16 %v600
        %v1253 = vunpack.c.l.b16 %v601
        %v1254 = vpack.c.b16 %v1251, %v1250
        %v1255 = vpack.c.b16 %v1253, %v1252
        %v1259 = vsel %vm758, %v1244, 0
        %v1262 = vsel %vm758, %v1245, 0
        %1264 = vmatprep.subr.bf16.mxu0 0
        %1265 = vmatpush1.bf16.msra.mxu0 %v1254
        %1266 = vmatprep.subr.bf16.mxu0 0
        %1267 = vmatpush1.bf16.msra.mxu0 %v1255
        %1268 = vmatprep.subr.bf16.mxu0 0
        %1269 = vmatpush1.bf16.msra.mxu0 0
        %1270 = vmatprep.subr.bf16.mxu0 0
        %1271 = vmatpush1.bf16.msra.mxu0 0
        %1272 = vmatprep.subr.bf16.mxu0 0
        %1273 = vmatpush1.bf16.msra.mxu0 0
        %1274 = vmatprep.subr.bf16.mxu0 0
        %1275 = vmatpush1.bf16.msra.mxu0 0
        %1276 = vmatprep.subr.bf16.mxu0 0
        %1277 = vmatpush1.bf16.msra.mxu0 0
        %1278 = vmatprep.subr.bf16.mxu0 0
        %1279 = vmatpush1.bf16.msra.mxu0 0
        %1280 = vmatprep.subr.bf16.mxu0 0
        %1281 = vmatpush1.bf16.msra.mxu0 0
        %1282 = vmatprep.subr.bf16.mxu0 0
        %1283 = vmatpush1.bf16.msra.mxu0 0
        %1284 = vmatprep.subr.bf16.mxu0 0
        %1285 = vmatpush1.bf16.msra.mxu0 0
        %1286 = vmatprep.subr.bf16.mxu0 0
        %1287 = vmatpush1.bf16.msra.mxu0 0
        %1288 = vmatprep.subr.bf16.mxu0 0
        %1289 = vmatpush1.bf16.msra.mxu0 0
        %1290 = vmatprep.subr.bf16.mxu0 0
        %1291 = vmatpush1.bf16.msra.mxu0 0
        %1292 = vmatprep.subr.bf16.mxu0 0
        %1293 = vmatpush1.bf16.msra.mxu0 0
        %1294 = vmatprep.subr.bf16.mxu0 0
        %1295 = vmatpush1.bf16.msra.mxu0 0
        %1296 = vmatprep.mubr.bf16.mxu0 0
        %1297 = vmatmul.mubr.bf16.gmra.mrb[0].mxu0 %v1259
        %v1298 = vpop.f32.mrb[0].mxu0
        %v1299 = vadd.f32 %v650, %v1298
        %v1300 = vpop.f32.mrb[0].mxu0
        %v1301 = vpop.f32.mrb[0].mxu0
        %v1302 = vadd.f32 %v650, %v1301
        %v1303 = vpop.f32.mrb[0].mxu0
        %1304 = vmatprep.mubr.bf16.mxu0 0
        %1305 = vmatmul.mubr.bf16.gmra.mrb[0].mxu0 %v1262
        %v1306 = vpop.f32.mrb[0].mxu0
        %v1307 = vadd.f32 %v650, %v1306
        %v1308 = vpop.f32.mrb[0].mxu0
        %v1309 = vpop.f32.mrb[0].mxu0
        %v1310 = vpop.f32.mrb[0].mxu0
        %1311 = vdwg.mxu0
        %v1312 = vmul.f32 %v1299, 0.5
        %v1313 = vmul.f32 %v1302, 0.5
        %v1314 = vmul.f32 %v1307, 0.5
        %v1315 = vmul.f32 %v1299, 0.70710677
        %v1316 = vmul.f32 %v1302, 0.70710677
        %v1317 = vmul.f32 %v1307, 0.70710677
        %v1318 = verf.f32.pop %v1315
        %v1319 = verf.f32.pop %v1316
        %v1320 = verf.f32.pop %v1317
        %v1321 = vadd.f32 %v1318, 1.0
        %v1322 = vadd.f32 %v1319, 1.0
        %v1323 = vadd.f32 %v1320, 1.0
        %v1324 = vmul.f32 %v1312, %v1321
        %v1325 = vmul.f32 %v1313, %v1322
        %v1326 = vmul.f32 %v1314, %v1323
        %v1327 = vpack.c.bf16 %v1325, %v1324
        %v1328 = vpack.c.bf16 %v1326, %v1326
        %v1337 = vunpack.c.l.b16 %v602
        %v1338 = vunpack.c.l.b16 %v603
        %v1339 = vunpack.c.l.b16 %v604
        %v1340 = vunpack.c.l.b16 %v605
        %v1341 = vunpack.c.l.b16 %v606
        %v1342 = vunpack.c.l.b16 %v607
        %v1343 = vunpack.c.l.b16 %v608
        %v1344 = vunpack.c.l.b16 %v609
        %v1345 = vpack.c.b16 %v1338, %v1337
        %v1346 = vpack.c.b16 %v1340, %v1339
        %v1347 = vpack.c.b16 %v1342, %v1341
        %v1348 = vpack.c.b16 %v1344, %v1343
        %v1354 = vsel %vm703, %v1327, 0
        %v1357 = vsel %vm703, %v1328, 0
        %1359 = vmatprep.subr.bf16.mxu0 0
        %1360 = vmatpush1.bf16.msra.mxu0 %v1345
        %1361 = vmatprep.subr.bf16.mxu0 0
        %1362 = vmatpush1.bf16.msra.mxu0 %v1346
        %1363 = vmatprep.subr.bf16.mxu0 0
        %1364 = vmatpush1.bf16.msra.mxu0 %v1347
        %1365 = vmatprep.subr.bf16.mxu0 0
        %1366 = vmatpush1.bf16.msra.mxu0 %v1348
        %1367 = vmatprep.subr.bf16.mxu0 0
        %1368 = vmatpush1.bf16.msra.mxu0 0
        %1369 = vmatprep.subr.bf16.mxu0 0
        %1370 = vmatpush1.bf16.msra.mxu0 0
        %1371 = vmatprep.subr.bf16.mxu0 0
        %1372 = vmatpush1.bf16.msra.mxu0 0
        %1373 = vmatprep.subr.bf16.mxu0 0
        %1374 = vmatpush1.bf16.msra.mxu0 0
        %1375 = vmatprep.subr.bf16.mxu0 0
        %1376 = vmatpush1.bf16.msra.mxu0 0
        %1377 = vmatprep.subr.bf16.mxu0 0
        %1378 = vmatpush1.bf16.msra.mxu0 0
        %1379 = vmatprep.subr.bf16.mxu0 0
        %1380 = vmatpush1.bf16.msra.mxu0 0
        %1381 = vmatprep.subr.bf16.mxu0 0
        %1382 = vmatpush1.bf16.msra.mxu0 0
        %1383 = vmatprep.subr.bf16.mxu0 0
        %1384 = vmatpush1.bf16.msra.mxu0 0
        %1385 = vmatprep.subr.bf16.mxu0 0
        %1386 = vmatpush1.bf16.msra.mxu0 0
        %1387 = vmatprep.subr.bf16.mxu0 0
        %1388 = vmatpush1.bf16.msra.mxu0 0
        %1389 = vmatprep.subr.bf16.mxu0 0
        %1390 = vmatpush1.bf16.msra.mxu0 0
        %1391 = vmatprep.mubr.bf16.mxu0 0
        %1392 = vmatmul.mubr.bf16.gmra.mrb[0].mxu0 %v1354
        %v1393 = vpop.f32.mrb[0].mxu0
        %v1394 = vadd.f32 %v657, %v1393
        %v1395 = vpop.f32.mrb[0].mxu0
        %v1396 = vpop.f32.mrb[0].mxu0
        %v1397 = vadd.f32 %v657, %v1396
        %v1398 = vpop.f32.mrb[0].mxu0
        %1399 = vmatprep.mubr.bf16.mxu0 0
        %1400 = vmatmul.mubr.bf16.gmra.mrb[0].mxu0 %v1357
        %v1401 = vpop.f32.mrb[0].mxu0
        %v1402 = vadd.f32 %v657, %v1401
        %v1403 = vpop.f32.mrb[0].mxu0
        %v1404 = vpop.f32.mrb[0].mxu0
        %v1405 = vpop.f32.mrb[0].mxu0
        %1406 = vdwg.mxu0
        %v1407 = vadd.f32 %v1394, %v1196
        %v1408 = vadd.f32 %v1397, %v1197
        %v1409 = vadd.f32 %v1402, %v1198
        %1410 = vst.msk [vmem:[#allocation2] sm:$0xff] %vm758, %v1407
        %1411 = vst.msk [vmem:[#allocation2 + $0x8] sm:$0xff] %vm758, %v1408
        %1412 = vst.msk [vmem:[#allocation2 + $0x10] sm:$0xff] %vm758, %v1409
        %v1413 = vld [vmem:[#allocation2] sm:$0xff]
        %v1414 = vld [vmem:[#allocation2 + $0x8] sm:$0xff]
        %v1415 = vld [vmem:[#allocation2 + $0x10] sm:$0xff]
        %v1416 = vsel %vm758, %v1413, 0.0
        %1417 = vadd.xlane.f32.xlu0 %v1416
        %v1418 = vpop.xlane.xlu0 %1417
        %v1419 = vsel %vm758, %v1414, 0.0
        %1420 = vadd.xlane.f32.xlu0 %v1419
        %v1421 = vpop.xlane.xlu0 %1420
        %v1422 = vsel %vm758, %v1415, 0.0
        %1423 = vadd.xlane.f32.xlu0 %v1422
        %v1424 = vpop.xlane.xlu0 %1423
        %v1425 = vmul.f32 %v1418, %v774
        %v1426 = vmul.f32 %v1421, %v774
        %v1427 = vmul.f32 %v1424, %v774
        %v1428 = vsub.f32 %v1413, %v1425
        %v1429 = vsub.f32 %v1414, %v1426
        %v1430 = vsub.f32 %v1415, %v1427
        %v1431 = vmul.f32 %v1428, %v1428
        %v1432 = vmul.f32 %v1429, %v1429
        %v1433 = vmul.f32 %v1430, %v1430
        %v1434 = vsel %vm758, %v1431, 0.0
        %1435 = vadd.xlane.f32.xlu0 %v1434
        %v1436 = vpop.xlane.xlu0 %1435
        %v1437 = vsel %vm758, %v1432, 0.0
        %1438 = vadd.xlane.f32.xlu0 %v1437
        %v1439 = vpop.xlane.xlu0 %1438
        %v1440 = vsel %vm758, %v1433, 0.0
        %1441 = vadd.xlane.f32.xlu0 %v1440
        %v1442 = vpop.xlane.xlu0 %1441
        %v1443 = vmul.f32 %v1436, %v774
        %v1444 = vmul.f32 %v1439, %v774
        %v1445 = vmul.f32 %v1442, %v774
        %v1446 = vadd.f32 %v1443, 1e-05
        %v1447 = vadd.f32 %v1444, 1e-05
        %v1448 = vadd.f32 %v1445, 1e-05
        %v1449 = vrsqrt.pop %v1446
        %v1450 = vrsqrt.pop %v1447
        %v1451 = vrsqrt.pop %v1448
        %v1452 = vmul.f32 %v1428, %v1449
        %v1453 = vmul.f32 %v1429, %v1450
        %v1454 = vmul.f32 %v1430, %v1451
        %v1455 = vmul.f32 %v1452, %v615
        %v1456 = vmul.f32 %v1453, %v615
        %v1457 = vmul.f32 %v1454, %v615
        %v1458 = vadd.f32 %v1455, %v622
        %v1459 = vadd.f32 %v1456, %v622
        %v1460 = vadd.f32 %v1457, %v622
        %v1461 = vpack.c.bf16 %v1459, %v1458
        %v1462 = vpack.c.bf16 %v1460, %v1460
        %v1464 = vsel %vm758, %v1461, 0
        %v1467 = vsel %vm758, %v1462, 0
        %1469 = vmatprep.subr.bf16.mxu0 %v834
        %1470 = vmatpush1.bf16.msra.mxu0 %v833
        %1471 = vmatprep.subr.bf16.mxu0 %v837
        %1472 = vmatpush1.bf16.msra.mxu0 %v836
        %1473 = vmatprep.subr.bf16.mxu0 0
        %1474 = vmatpush1.bf16.msra.mxu0 0
        %1475 = vmatprep.subr.bf16.mxu0 0
        %1476 = vmatpush1.bf16.msra.mxu0 0
        %1477 = vmatprep.subr.bf16.mxu0 0
        %1478 = vmatpush1.bf16.msra.mxu0 0
        %1479 = vmatprep.subr.bf16.mxu0 0
        %1480 = vmatpush1.bf16.msra.mxu0 0
        %1481 = vmatprep.subr.bf16.mxu0 0
        %1482 = vmatpush1.bf16.msra.mxu0 0
        %1483 = vmatprep.subr.bf16.mxu0 0
        %1484 = vmatpush1.bf16.msra.mxu0 0
        %1485 = vmatprep.subr.bf16.mxu0 0
        %1486 = vmatpush1.bf16.msra.mxu0 0
        %1487 = vmatprep.subr.bf16.mxu0 0
        %1488 = vmatpush1.bf16.msra.mxu0 0
        %1489 = vmatprep.subr.bf16.mxu0 0
        %1490 = vmatpush1.bf16.msra.mxu0 0
        %1491 = vmatprep.subr.bf16.mxu0 0
        %1492 = vmatpush1.bf16.msra.mxu0 0
        %1493 = vmatprep.subr.bf16.mxu0 0
        %1494 = vmatpush1.bf16.msra.mxu0 0
        %1495 = vmatprep.subr.bf16.mxu0 0
        %1496 = vmatpush1.bf16.msra.mxu0 0
        %1497 = vmatprep.subr.bf16.mxu0 0
        %1498 = vmatpush1.bf16.msra.mxu0 0
        %1499 = vmatprep.subr.bf16.mxu0 0
        %1500 = vmatpush1.bf16.msra.mxu0 0
        %1501 = vmatprep.mubr.bf16.mxu0 0
        %1502 = vmatmul.mubr.bf16.gmra.mrb[0].mxu0 %v1464
        %v1503 = vpop.f32.mrb[0].mxu0
        %v1504 = vadd.f32 0.0, %v1503
        %v1505 = vpop.f32.mrb[0].mxu0
        %v1506 = vadd.f32 0.0, %v1505
        %v1507 = vpop.f32.mrb[0].mxu0
        %v1508 = vadd.f32 0.0, %v1507
        %v1509 = vpop.f32.mrb[0].mxu0
        %v1510 = vadd.f32 0.0, %v1509
        %1511 = vmatprep.mubr.bf16.mxu0 0
        %1512 = vmatmul.mubr.bf16.gmra.mrb[0].mxu0 %v1467
        %v1513 = vpop.f32.mrb[0].mxu0
        %v1514 = vadd.f32 0.0, %v1513
        %v1515 = vpop.f32.mrb[0].mxu0
        %v1516 = vadd.f32 0.0, %v1515
        %v1517 = vpop.f32.mrb[0].mxu0
        %v1518 = vpop.f32.mrb[0].mxu0
        %1519 = vdwg.mxu0
        %1520 = vmatprep.subr.bf16.mxu0 0
        %1521 = vmatpush1.bf16.msra.mxu0 %v835
        %1522 = vmatprep.subr.bf16.mxu0 0
        %1523 = vmatpush1.bf16.msra.mxu0 %v838
        %1524 = vmatprep.subr.bf16.mxu0 0
        %1525 = vmatpush1.bf16.msra.mxu0 0
        %1526 = vmatprep.subr.bf16.mxu0 0
        %1527 = vmatpush1.bf16.msra.mxu0 0
        %1528 = vmatprep.subr.bf16.mxu0 0
        %1529 = vmatpush1.bf16.msra.mxu0 0
        %1530 = vmatprep.subr.bf16.mxu0 0
        %1531 = vmatpush1.bf16.msra.mxu0 0
        %1532 = vmatprep.subr.bf16.mxu0 0
        %1533 = vmatpush1.bf16.msra.mxu0 0
        %1534 = vmatprep.subr.bf16.mxu0 0
        %1535 = vmatpush1.bf16.msra.mxu0 0
        %1536 = vmatprep.subr.bf16.mxu0 0
        %1537 = vmatpush1.bf16.msra.mxu0 0
        %1538 = vmatprep.subr.bf16.mxu0 0
        %1539 = vmatpush1.bf16.msra.mxu0 0
        %1540 = vmatprep.subr.bf16.mxu0 0
        %1541 = vmatpush1.bf16.msra.mxu0 0
        %1542 = vmatprep.subr.bf16.mxu0 0
        %1543 = vmatpush1.bf16.msra.mxu0 0
        %1544 = vmatprep.subr.bf16.mxu0 0
        %1545 = vmatpush1.bf16.msra.mxu0 0
        %1546 = vmatprep.subr.bf16.mxu0 0
        %1547 = vmatpush1.bf16.msra.mxu0 0
        %1548 = vmatprep.subr.bf16.mxu0 0
        %1549 = vmatpush1.bf16.msra.mxu0 0
        %1550 = vmatprep.subr.bf16.mxu0 0
        %1551 = vmatpush1.bf16.msra.mxu0 0
        %1552 = vmatprep.mubr.bf16.mxu0 0
        %1553 = vmatmul.mubr.bf16.gmra.mrb[0].mxu0 %v1464
        %v1554 = vpop.f32.mrb[0].mxu0
        %v1555 = vadd.f32 0.0, %v1554
        %v1556 = vpop.f32.mrb[0].mxu0
        %v1557 = vpop.f32.mrb[0].mxu0
        %v1558 = vadd.f32 0.0, %v1557
        %v1559 = vpop.f32.mrb[0].mxu0
        %1560 = vmatprep.mubr.bf16.mxu0 0
        %1561 = vmatmul.mubr.bf16.gmra.mrb[0].mxu0 %v1467
        %v1562 = vpop.f32.mrb[0].mxu0
        %v1563 = vadd.f32 0.0, %v1562
        %v1564 = vpop.f32.mrb[0].mxu0
        %v1565 = vpop.f32.mrb[0].mxu0
        %v1566 = vpop.f32.mrb[0].mxu0
        %1567 = vdwg.mxu0
        %v1568 = vpack.c.bf16 %v1508, %v1504
        %v1569 = vpack.c.bf16 %v1510, %v1506
        %v1570 = vpack.c.bf16 %v1558, %v1555
        %v1571 = vpack.c.bf16 %v1514, %v1514
        %v1572 = vpack.c.bf16 %v1516, %v1516
        %v1573 = vpack.c.bf16 %v1563, %v1563
        %1574 = vmatprep.subr.bf16.mxu0 0
        %1575 = vmatpush1.bf16.xpose.msra.mxu0 %v1569
        %1576 = vmatprep.subr.bf16.mxu0 0
        %1577 = vmatpush1.bf16.xpose.msra.mxu0 %v1572
        %1578 = vmatprep.subr.bf16.mxu0 0
        %1579 = vmatpush1.bf16.xpose.msra.mxu0 0
        %1580 = vmatprep.subr.bf16.mxu0 0
        %1581 = vmatpush1.bf16.xpose.msra.mxu0 0
        %1582 = vmatprep.subr.bf16.mxu0 0
        %1583 = vmatpush1.bf16.xpose.msra.mxu0 0
        %1584 = vmatprep.subr.bf16.mxu0 0
        %1585 = vmatpush1.bf16.xpose.msra.mxu0 0
        %1586 = vmatprep.subr.bf16.mxu0 0
        %1587 = vmatpush1.bf16.xpose.msra.mxu0 0
        %1588 = vmatprep.subr.bf16.mxu0 0
        %1589 = vmatpush1.bf16.xpose.msra.mxu0 0
        %1590 = vmatprep.subr.bf16.mxu0 0
        %1591 = vmatpush1.bf16.xpose.msra.mxu0 0
        %1592 = vmatprep.subr.bf16.mxu0 0
        %1593 = vmatpush1.bf16.xpose.msra.mxu0 0
        %1594 = vmatprep.subr.bf16.mxu0 0
        %1595 = vmatpush1.bf16.xpose.msra.mxu0 0
        %1596 = vmatprep.subr.bf16.mxu0 0
        %1597 = vmatpush1.bf16.xpose.msra.mxu0 0
        %1598 = vmatprep.subr.bf16.mxu0 0
        %1599 = vmatpush1.bf16.xpose.msra.mxu0 0
        %1600 = vmatprep.subr.bf16.mxu0 0
        %1601 = vmatpush1.bf16.xpose.msra.mxu0 0
        %1602 = vmatprep.subr.bf16.mxu0 0
        %1603 = vmatpush1.bf16.xpose.msra.mxu0 0
        %1604 = vmatprep.subr.bf16.mxu0 0
        %1605 = vmatpush1.bf16.xpose.msra.mxu0 0
        %1606 = vmatprep.mubr.bf16.mxu0 0
        %1607 = vmatmul.mubr.bf16.gmra.mrb[0].mxu0 %v1568
        %v1608 = vpop.f32.mrb[0].mxu0
        %v1609 = vadd.f32 %v662, %v1608
        %v1610 = vpop.f32.mrb[0].mxu0
        %v1611 = vpop.f32.mrb[0].mxu0
        %v1612 = vadd.f32 %v662, %v1611
        %v1613 = vpop.f32.mrb[0].mxu0
        %1614 = vmatprep.mubr.bf16.mxu0 0
        %1615 = vmatmul.mubr.bf16.gmra.mrb[0].mxu0 %v1571
        %v1616 = vpop.f32.mrb[0].mxu0
        %v1617 = vadd.f32 %v662, %v1616
        %v1618 = vpop.f32.mrb[0].mxu0
        %v1619 = vpop.f32.mrb[0].mxu0
        %v1620 = vpop.f32.mrb[0].mxu0
        %1621 = vdwg.mxu0
        %v1622 = vsel %vm1004, %v1609, -inf
        %1623 = vmax.xlane.f32.xlu0 %v1622
        %v1624 = vpop.xlane.xlu0 %1623
        %v1625 = vsel %vm1004, %v1612, -inf
        %1626 = vmax.xlane.f32.xlu0 %v1625
        %v1627 = vpop.xlane.xlu0 %1626
        %v1628 = vsel %vm1004, %v1617, -inf
        %1629 = vmax.xlane.f32.xlu0 %v1628
        %v1630 = vpop.xlane.xlu0 %1629
        %v1631 = vsub.f32 %v1609, %v1624
        %v1632 = vsub.f32 %v1612, %v1627
        %v1633 = vsub.f32 %v1617, %v1630
        %v1634 = vmul.f32 %v1631, 1.442695
        %v1635 = vpow.pop %v1634
        %v1636 = vmul.f32 %v1632, 1.442695
        %v1637 = vpow.pop %v1636
        %v1638 = vmul.f32 %v1633, 1.442695
        %v1639 = vpow.pop %v1638
        %v1640 = vsel %vm1004, %v1635, 0.0
        %1641 = vadd.xlane.f32.xlu0 %v1640
        %v1642 = vpop.xlane.xlu0 %1641
        %v1643 = vsel %vm1004, %v1637, 0.0
        %1644 = vadd.xlane.f32.xlu0 %v1643
        %v1645 = vpop.xlane.xlu0 %1644
        %v1646 = vsel %vm1004, %v1639, 0.0
        %1647 = vadd.xlane.f32.xlu0 %v1646
        %v1648 = vpop.xlane.xlu0 %1647
        %v1649 = vrcp.pop %v1642
        %v1650 = vrcp.pop %v1645
        %v1651 = vrcp.pop %v1648
        %v1652 = vmul.f32 %v1635, %v1649
        %v1653 = vmul.f32 %v1637, %v1650
        %v1654 = vmul.f32 %v1639, %v1651
        %v1655 = vpack.c.bf16 %v1653, %v1652
        %v1656 = vpack.c.bf16 %v1654, %v1654
        %v1658 = vsel %vm1004, %v1655, 0
        %v1661 = vsel %vm1004, %v1656, 0
        %v1664 = vsel %vm1046, %v1573, 0
        %1666 = vmatprep.subr.bf16.mxu0 0
        %1667 = vmatpush1.bf16.msra.mxu0 %v1570
        %1668 = vmatprep.subr.bf16.mxu0 0
        %1669 = vmatpush1.bf16.msra.mxu0 %v1664
        %1670 = vmatprep.subr.bf16.mxu0 0
        %1671 = vmatpush1.bf16.msra.mxu0 0
        %1672 = vmatprep.subr.bf16.mxu0 0
        %1673 = vmatpush1.bf16.msra.mxu0 0
        %1674 = vmatprep.subr.bf16.mxu0 0
        %1675 = vmatpush1.bf16.msra.mxu0 0
        %1676 = vmatprep.subr.bf16.mxu0 0
        %1677 = vmatpush1.bf16.msra.mxu0 0
        %1678 = vmatprep.subr.bf16.mxu0 0
        %1679 = vmatpush1.bf16.msra.mxu0 0
        %1680 = vmatprep.subr.bf16.mxu0 0
        %1681 = vmatpush1.bf16.msra.mxu0 0
        %1682 = vmatprep.subr.bf16.mxu0 0
        %1683 = vmatpush1.bf16.msra.mxu0 0
        %1684 = vmatprep.subr.bf16.mxu0 0
        %1685 = vmatpush1.bf16.msra.mxu0 0
        %1686 = vmatprep.subr.bf16.mxu0 0
        %1687 = vmatpush1.bf16.msra.mxu0 0
        %1688 = vmatprep.subr.bf16.mxu0 0
        %1689 = vmatpush1.bf16.msra.mxu0 0
        %1690 = vmatprep.subr.bf16.mxu0 0
        %1691 = vmatpush1.bf16.msra.mxu0 0
        %1692 = vmatprep.subr.bf16.mxu0 0
        %1693 = vmatpush1.bf16.msra.mxu0 0
        %1694 = vmatprep.subr.bf16.mxu0 0
        %1695 = vmatpush1.bf16.msra.mxu0 0
        %1696 = vmatprep.subr.bf16.mxu0 0
        %1697 = vmatpush1.bf16.msra.mxu0 0
        %1698 = vmatprep.mubr.bf16.mxu0 0
        %1699 = vmatmul.mubr.bf16.gmra.mrb[0].mxu0 %v1658
        %v1700 = vpop.f32.mrb[0].mxu0
        %v1701 = vadd.f32 0.0, %v1700
        %v1702 = vpop.f32.mrb[0].mxu0
        %v1703 = vpop.f32.mrb[0].mxu0
        %v1704 = vadd.f32 0.0, %v1703
        %v1705 = vpop.f32.mrb[0].mxu0
        %1706 = vmatprep.mubr.bf16.mxu0 0
        %1707 = vmatmul.mubr.bf16.gmra.mrb[0].mxu0 %v1661
        %v1708 = vpop.f32.mrb[0].mxu0
        %v1709 = vadd.f32 0.0, %v1708
        %v1710 = vpop.f32.mrb[0].mxu0
        %v1711 = vpop.f32.mrb[0].mxu0
        %v1712 = vpop.f32.mrb[0].mxu0
        %1713 = vdwg.mxu0
        %v1714 = vpack.c.bf16 %v1704, %v1701
        %v1715 = vpack.c.bf16 %v1709, %v1709
        %1716 = vmatprep.subr.bf16.mxu0 0
        %1717 = vmatpush1.bf16.msra.mxu0 %v1132
        %1718 = vmatprep.subr.bf16.mxu0 0
        %1719 = vmatpush1.bf16.msra.mxu0 %v1133
        %1720 = vmatprep.subr.bf16.mxu0 0
        %1721 = vmatpush1.bf16.msra.mxu0 %v1134
        %1722 = vmatprep.subr.bf16.mxu0 0
        %1723 = vmatpush1.bf16.msra.mxu0 %v1135
        %1724 = vmatprep.subr.bf16.mxu0 0
        %1725 = vmatpush1.bf16.msra.mxu0 %v1136
        %1726 = vmatprep.subr.bf16.mxu0 0
        %1727 = vmatpush1.bf16.msra.mxu0 %v1137
        %1728 = vmatprep.subr.bf16.mxu0 0
        %1729 = vmatpush1.bf16.msra.mxu0 %v1138
        %1730 = vmatprep.subr.bf16.mxu0 0
        %1731 = vmatpush1.bf16.msra.mxu0 %v1139
        %1732 = vmatprep.subr.bf16.mxu0 0
        %1733 = vmatpush1.bf16.msra.mxu0 0
        %1734 = vmatprep.subr.bf16.mxu0 0
        %1735 = vmatpush1.bf16.msra.mxu0 0
        %1736 = vmatprep.subr.bf16.mxu0 0
        %1737 = vmatpush1.bf16.msra.mxu0 0
        %1738 = vmatprep.subr.bf16.mxu0 0
        %1739 = vmatpush1.bf16.msra.mxu0 0
        %1740 = vmatprep.subr.bf16.mxu0 0
        %1741 = vmatpush1.bf16.msra.mxu0 0
        %1742 = vmatprep.subr.bf16.mxu0 0
        %1743 = vmatpush1.bf16.msra.mxu0 0
        %1744 = vmatprep.subr.bf16.mxu0 0
        %1745 = vmatpush1.bf16.msra.mxu0 0
        %1746 = vmatprep.subr.bf16.mxu0 0
        %1747 = vmatpush1.bf16.msra.mxu0 0
        %1748 = vmatprep.mubr.bf16.mxu0 0
        %1749 = vmatmul.mubr.bf16.gmra.mrb[0].mxu0 %v1714
        %v1750 = vpop.f32.mrb[0].mxu0
        %v1751 = vadd.f32 %v643, %v1750
        %v1752 = vpop.f32.mrb[0].mxu0
        %v1753 = vpop.f32.mrb[0].mxu0
        %v1754 = vadd.f32 %v643, %v1753
        %v1755 = vpop.f32.mrb[0].mxu0
        %1756 = vmatprep.mubr.bf16.mxu0 0
        %1757 = vmatmul.mubr.bf16.gmra.mrb[0].mxu0 %v1715
        %v1758 = vpop.f32.mrb[0].mxu0
        %v1759 = vadd.f32 %v643, %v1758
        %v1760 = vpop.f32.mrb[0].mxu0
        %v1761 = vpop.f32.mrb[0].mxu0
        %v1762 = vpop.f32.mrb[0].mxu0
        %1763 = vdwg.mxu0
        %v1764 = vadd.f32 %v1751, %v1413
        %v1765 = vadd.f32 %v1754, %v1414
        %v1766 = vadd.f32 %v1759, %v1415
        %v1767 = vsel %vm758, %v1764, 0.0
        %1768 = vadd.xlane.f32.xlu0 %v1767
        %v1769 = vpop.xlane.xlu0 %1768
        %v1770 = vsel %vm758, %v1765, 0.0
        %1771 = vadd.xlane.f32.xlu0 %v1770
        %v1772 = vpop.xlane.xlu0 %1771
        %v1773 = vsel %vm758, %v1766, 0.0
        %1774 = vadd.xlane.f32.xlu0 %v1773
        %v1775 = vpop.xlane.xlu0 %1774
        %v1776 = vmul.f32 %v1769, %v774
        %v1777 = vmul.f32 %v1772, %v774
        %v1778 = vmul.f32 %v1775, %v774
        %v1779 = vsub.f32 %v1764, %v1776
        %v1780 = vsub.f32 %v1765, %v1777
        %v1781 = vsub.f32 %v1766, %v1778
        %v1782 = vmul.f32 %v1779, %v1779
        %v1783 = vmul.f32 %v1780, %v1780
        %v1784 = vmul.f32 %v1781, %v1781
        %v1785 = vsel %vm758, %v1782, 0.0
        %1786 = vadd.xlane.f32.xlu0 %v1785
        %v1787 = vpop.xlane.xlu0 %1786
        %v1788 = vsel %vm758, %v1783, 0.0
        %1789 = vadd.xlane.f32.xlu0 %v1788
        %v1790 = vpop.xlane.xlu0 %1789
        %v1791 = vsel %vm758, %v1784, 0.0
        %1792 = vadd.xlane.f32.xlu0 %v1791
        %v1793 = vpop.xlane.xlu0 %1792
        %v1794 = vmul.f32 %v1787, %v774
        %v1795 = vmul.f32 %v1790, %v774
        %v1796 = vmul.f32 %v1793, %v774
        %v1797 = vadd.f32 %v1794, 1e-05
        %v1798 = vadd.f32 %v1795, 1e-05
        %v1799 = vadd.f32 %v1796, 1e-05
        %v1800 = vrsqrt.pop %v1797
        %v1801 = vrsqrt.pop %v1798
        %v1802 = vrsqrt.pop %v1799
        %v1803 = vmul.f32 %v1779, %v1800
        %v1804 = vmul.f32 %v1780, %v1801
        %v1805 = vmul.f32 %v1781, %v1802
        %v1806 = vmul.f32 %v1803, %v629
        %v1807 = vmul.f32 %v1804, %v629
        %v1808 = vmul.f32 %v1805, %v629
        %v1809 = vadd.f32 %v1806, %v636
        %v1810 = vadd.f32 %v1807, %v636
        %v1811 = vadd.f32 %v1808, %v636
        %v1812 = vpack.c.bf16 %v1810, %v1809
        %v1813 = vpack.c.bf16 %v1811, %v1811
        %v1815 = vsel %vm758, %v1812, 0
        %v1818 = vsel %vm758, %v1813, 0
        %1820 = vmatprep.subr.bf16.mxu0 0
        %1821 = vmatpush1.bf16.msra.mxu0 %v1254
        %1822 = vmatprep.subr.bf16.mxu0 0
        %1823 = vmatpush1.bf16.msra.mxu0 %v1255
        %1824 = vmatprep.subr.bf16.mxu0 0
        %1825 = vmatpush1.bf16.msra.mxu0 0
        %1826 = vmatprep.subr.bf16.mxu0 0
        %1827 = vmatpush1.bf16.msra.mxu0 0
        %1828 = vmatprep.subr.bf16.mxu0 0
        %1829 = vmatpush1.bf16.msra.mxu0 0
        %1830 = vmatprep.subr.bf16.mxu0 0
        %1831 = vmatpush1.bf16.msra.mxu0 0
        %1832 = vmatprep.subr.bf16.mxu0 0
        %1833 = vmatpush1.bf16.msra.mxu0 0
        %1834 = vmatprep.subr.bf16.mxu0 0
        %1835 = vmatpush1.bf16.msra.mxu0 0
        %1836 = vmatprep.subr.bf16.mxu0 0
        %1837 = vmatpush1.bf16.msra.mxu0 0
        %1838 = vmatprep.subr.bf16.mxu0 0
        %1839 = vmatpush1.bf16.msra.mxu0 0
        %1840 = vmatprep.subr.bf16.mxu0 0
        %1841 = vmatpush1.bf16.msra.mxu0 0
        %1842 = vmatprep.subr.bf16.mxu0 0
        %1843 = vmatpush1.bf16.msra.mxu0 0
        %1844 = vmatprep.subr.bf16.mxu0 0
        %1845 = vmatpush1.bf16.msra.mxu0 0
        %1846 = vmatprep.subr.bf16.mxu0 0
        %1847 = vmatpush1.bf16.msra.mxu0 0
        %1848 = vmatprep.subr.bf16.mxu0 0
        %1849 = vmatpush1.bf16.msra.mxu0 0
        %1850 = vmatprep.subr.bf16.mxu0 0
        %1851 = vmatpush1.bf16.msra.mxu0 0
        %1852 = vmatprep.mubr.bf16.mxu0 0
        %1853 = vmatmul.mubr.bf16.gmra.mrb[0].mxu0 %v1815
        %v1854 = vpop.f32.mrb[0].mxu0
        %v1855 = vadd.f32 %v650, %v1854
        %v1856 = vpop.f32.mrb[0].mxu0
        %v1857 = vpop.f32.mrb[0].mxu0
        %v1858 = vadd.f32 %v650, %v1857
        %v1859 = vpop.f32.mrb[0].mxu0
        %1860 = vmatprep.mubr.bf16.mxu0 0
        %1861 = vmatmul.mubr.bf16.gmra.mrb[0].mxu0 %v1818
        %v1862 = vpop.f32.mrb[0].mxu0
        %v1863 = vadd.f32 %v650, %v1862
        %v1864 = vpop.f32.mrb[0].mxu0
        %v1865 = vpop.f32.mrb[0].mxu0
        %v1866 = vpop.f32.mrb[0].mxu0
        %1867 = vdwg.mxu0
        %v1868 = vmul.f32 %v1855, 0.5
        %v1869 = vmul.f32 %v1858, 0.5
        %v1870 = vmul.f32 %v1863, 0.5
        %v1871 = vmul.f32 %v1855, 0.70710677
        %v1872 = vmul.f32 %v1858, 0.70710677
        %v1873 = vmul.f32 %v1863, 0.70710677
        %v1874 = verf.f32.pop %v1871
        %v1875 = verf.f32.pop %v1872
        %v1876 = verf.f32.pop %v1873
        %v1877 = vadd.f32 %v1874, 1.0
        %v1878 = vadd.f32 %v1875, 1.0
        %v1879 = vadd.f32 %v1876, 1.0
        %v1880 = vmul.f32 %v1868, %v1877
        %v1881 = vmul.f32 %v1869, %v1878
        %v1882 = vmul.f32 %v1870, %v1879
        %v1883 = vpack.c.bf16 %v1881, %v1880
        %v1884 = vpack.c.bf16 %v1882, %v1882
        %v1886 = vsel %vm703, %v1883, 0
        %v1889 = vsel %vm703, %v1884, 0
        %1891 = vmatprep.subr.bf16.mxu0 0
        %1892 = vmatpush1.bf16.msra.mxu0 %v1345
        %1893 = vmatprep.subr.bf16.mxu0 0
        %1894 = vmatpush1.bf16.msra.mxu0 %v1346
        %1895 = vmatprep.subr.bf16.mxu0 0
        %1896 = vmatpush1.bf16.msra.mxu0 %v1347
        %1897 = vmatprep.subr.bf16.mxu0 0
        %1898 = vmatpush1.bf16.msra.mxu0 %v1348
        %1899 = vmatprep.subr.bf16.mxu0 0
        %1900 = vmatpush1.bf16.msra.mxu0 0
        %1901 = vmatprep.subr.bf16.mxu0 0
        %1902 = vmatpush1.bf16.msra.mxu0 0
        %1903 = vmatprep.subr.bf16.mxu0 0
        %1904 = vmatpush1.bf16.msra.mxu0 0
        %1905 = vmatprep.subr.bf16.mxu0 0
        %1906 = vmatpush1.bf16.msra.mxu0 0
        %1907 = vmatprep.subr.bf16.mxu0 0
        %1908 = vmatpush1.bf16.msra.mxu0 0
        %1909 = vmatprep.subr.bf16.mxu0 0
        %1910 = vmatpush1.bf16.msra.mxu0 0
        %1911 = vmatprep.subr.bf16.mxu0 0
        %1912 = vmatpush1.bf16.msra.mxu0 0
        %1913 = vmatprep.subr.bf16.mxu0 0
        %1914 = vmatpush1.bf16.msra.mxu0 0
        %1915 = vmatprep.subr.bf16.mxu0 0
        %1916 = vmatpush1.bf16.msra.mxu0 0
        %1917 = vmatprep.subr.bf16.mxu0 0
        %1918 = vmatpush1.bf16.msra.mxu0 0
        %1919 = vmatprep.subr.bf16.mxu0 0
        %1920 = vmatpush1.bf16.msra.mxu0 0
        %1921 = vmatprep.subr.bf16.mxu0 0
        %1922 = vmatpush1.bf16.msra.mxu0 0
        %1923 = vmatprep.mubr.bf16.mxu0 0
        %1924 = vmatmul.mubr.bf16.gmra.mrb[0].mxu0 %v1886
        %v1925 = vpop.f32.mrb[0].mxu0
        %v1926 = vadd.f32 %v657, %v1925
        %v1927 = vpop.f32.mrb[0].mxu0
        %v1928 = vpop.f32.mrb[0].mxu0
        %v1929 = vadd.f32 %v657, %v1928
        %v1930 = vpop.f32.mrb[0].mxu0
        %1931 = vmatprep.mubr.bf16.mxu0 0
        %1932 = vmatmul.mubr.bf16.gmra.mrb[0].mxu0 %v1889
        %v1933 = vpop.f32.mrb[0].mxu0
        %v1934 = vadd.f32 %v657, %v1933
        %v1935 = vpop.f32.mrb[0].mxu0
        %v1936 = vpop.f32.mrb[0].mxu0
        %v1937 = vpop.f32.mrb[0].mxu0
        %1938 = vdwg.mxu0
        %v1939 = vadd.f32 %v1926, %v1764
        %v1940 = vadd.f32 %v1929, %v1765
        %v1941 = vadd.f32 %v1934, %v1766
        %1942 = vst.msk [vmem:[#allocation2] sm:$0xff] %vm758, %v1939
        %1943 = vst.msk [vmem:[#allocation2 + $0x8] sm:$0xff] %vm758, %v1940
        %1944 = vst.msk [vmem:[#allocation2 + $0x10] sm:$0xff] %vm758, %v1941
        %v1945 = vld [vmem:[#allocation2] sm:$0x1]
        %v1946 = vld [vmem:[%s14] sm:$0x1]
        %v1947 = vld [vmem:[%s15] sm:$0x1]
        %vm1948 = vcmask 253952
        %v1949 = vsel %vm1948, %v1945, 0.0
        %1950 = vadd.xlane.f32.xlu0 %v1949
        %v1951 = vpop.xlane.xlu0 %1950
        %v1952 = vmul.f32 %v1951, %v774
        %v1953 = vsub.f32 %v1945, %v1952
        %v1954 = vmul.f32 %v1953, %v1953
        %v1955 = vsel %vm1948, %v1954, 0.0
        %1956 = vadd.xlane.f32.xlu0 %v1955
        %v1957 = vpop.xlane.xlu0 %1956
        %v1958 = vmul.f32 %v1957, %v774
        %v1959 = vadd.f32 %v1958, 1e-05
        %v1960 = vrsqrt.pop %v1959
        %v1961 = vmul.f32 %v1953, %v1960
        %v1962 = vmul.f32 %v1961, %v1946
        %v1963 = vadd.f32 %v1962, %v1947
        %v1964 = vpack.c.bf16 %v1963, %v1963
        %v1965 = vld [vmem:[%s16] sm:$0xf]
        %v1966 = vld [vmem:[%s16 + $0x4] sm:$0xf]
        %v1967 = vld [vmem:[%s16 + $0x8] sm:$0xf]
        %v1968 = vld [vmem:[%s16 + $0xc] sm:$0xf]
        %v1969 = vld [vmem:[%s17] sm:$0x1]
        %v1974 = vunpack.c.l.b16 %v1965
        %v1975 = vunpack.c.l.b16 %v1966
        %v1976 = vunpack.c.l.b16 %v1967
        %v1977 = vunpack.c.l.b16 %v1968
        %v1978 = vpack.c.b16 %v1975, %v1974
        %v1979 = vpack.c.b16 %v1977, %v1976
        %v1983 = vsel %vm758, %v1964, 0
        %1985 = vmatprep.subr.bf16.mxu0 0
        %1986 = vmatpush1.bf16.msra.mxu0 %v1978
        %1987 = vmatprep.subr.bf16.mxu0 0
        %1988 = vmatpush1.bf16.msra.mxu0 %v1979
        %1989 = vmatprep.subr.bf16.mxu0 0
        %1990 = vmatpush1.bf16.msra.mxu0 0
        %1991 = vmatprep.subr.bf16.mxu0 0
        %1992 = vmatpush1.bf16.msra.mxu0 0
        %1993 = vmatprep.subr.bf16.mxu0 0
        %1994 = vmatpush1.bf16.msra.mxu0 0
        %1995 = vmatprep.subr.bf16.mxu0 0
        %1996 = vmatpush1.bf16.msra.mxu0 0
        %1997 = vmatprep.subr.bf16.mxu0 0
        %1998 = vmatpush1.bf16.msra.mxu0 0
        %1999 = vmatprep.subr.bf16.mxu0 0
        %2000 = vmatpush1.bf16.msra.mxu0 0
        %2001 = vmatprep.subr.bf16.mxu0 0
        %2002 = vmatpush1.bf16.msra.mxu0 0
        %2003 = vmatprep.subr.bf16.mxu0 0
        %2004 = vmatpush1.bf16.msra.mxu0 0
        %2005 = vmatprep.subr.bf16.mxu0 0
        %2006 = vmatpush1.bf16.msra.mxu0 0
        %2007 = vmatprep.subr.bf16.mxu0 0
        %2008 = vmatpush1.bf16.msra.mxu0 0
        %2009 = vmatprep.subr.bf16.mxu0 0
        %2010 = vmatpush1.bf16.msra.mxu0 0
        %2011 = vmatprep.subr.bf16.mxu0 0
        %2012 = vmatpush1.bf16.msra.mxu0 0
        %2013 = vmatprep.subr.bf16.mxu0 0
        %2014 = vmatpush1.bf16.msra.mxu0 0
        %2015 = vmatprep.subr.bf16.mxu0 0
        %2016 = vmatpush1.bf16.msra.mxu0 0
        %2017 = vmatprep.mubr.bf16.mxu0 0
        %2018 = vmatmul.mubr.bf16.gmra.mrb[0].mxu0 %v1983
        %v2019 = vpop.f32.mrb[0].mxu0
        %v2020 = vadd.f32 %v1969, %v2019
        %v2021 = vpop.f32.mrb[0].mxu0
        %v2022 = vpop.f32.mrb[0].mxu0
        %v2023 = vpop.f32.mrb[0].mxu0
        %2024 = vdwg.mxu0
        %2025 = vst [vmem:[%s567] sm:$0x1] %v2020
        %s2026 = sand.u32 %s423, 1
        %s2027 = scalar_lea.sflag [#allocation4], %s2026
        %s2028 = sand.u32 %s423, 1
        %s2029 = scalar_lea.vmem [#allocation3], %s2028
        // Predicated region
        $region93: #{vit_forward.1} parent=91 // pred_check
          %p2030 = pneg %p433
        $region94: #{vit_forward.1} parent=91 // pred_check_branch
          %2032 = sbr.rel (%p2030) target = $region96
        $region95: #{vit_forward.1} parent=91 // pred_region
          %s2034 = ssub.s32 16, 16
          %2035 = vsyncadd %s2027, %s2034
          %s2036 = smul.addr %s32, 16
          %s2037 = scalar_lea.hbm %s18, %s2036
          %s2039 = sshll.u32 %s2029, 4
          %s2040 = int_to_ptr.vmem [resolvable:$true] %s2039
          %2042 = dma.vmem_to_hbm [thread:$0]  %s2040, 16, %s2037, %s2027
        $region96: #{vit_forward.1} parent=91 // pred_fallthru
          _
      $region92: #{vit_forward.1} parent=5 // pred_fallthru
        _
      %p2043 = scmp.le.s32.totalorder 2, %s27
      // Predicated region
      $region97: #{vit_forward.1} parent=5 // pred_check
        %p2044 = pneg %p2043
      $region98: #{vit_forward.1} parent=5 // pred_check_branch
        %2046 = sbr.rel (%p2044) target = $region100
      $region99: #{vit_forward.1} parent=5 // pred_region
        %s2047 = ssub.s32 %s27, 2
        // Predicated region
        $region101: #{vit_forward.1} parent=99 // pred_check
          %p2048 = pneg %p439
        $region102: #{vit_forward.1} parent=99 // pred_check_branch
          %2050 = sbr.rel (%p2048) target = $region104
        $region103: #{vit_forward.1} parent=99 // pred_region
          %s2051 = sand.u32 %s424, 1
          %s2052 = scalar_lea.sflag [#allocation4], %s2051
          %s2053 = sand.u32 %s424, 1
          %s2054 = scalar_lea.vmem [#allocation3], %s2053
          %2055 = dma.done %s2052, 16
        $region104: #{vit_forward.1} parent=99 // pred_fallthru
          _
      $region100: #{vit_forward.1} parent=5 // pred_fallthru
        _
    $region6: #{vit_forward.1} parent=1 // loop_footer
      %s31 = sadd.s32 1, %s27
    $region7: #{vit_forward.1} parent=1 // loop_footer_branch
      %26 = sbr.rel target = $region3
    $region8: #{vit_forward.1} parent=1 // loop_exit
      _
    %2056 = vsyncpa [#allocation4], 1
    %s2057 = scalar_lea.sflag [#allocation4], 1
    %2058 = vsyncpa %s2057, 1

</llo_original>
